<compile_context>
chip_gen: v5e
topology: v5e:2x2
jax: 0.10.0
libtpu: 0.0.40
codegen_flags: <defaults>
</compile_context>

<pallas_src>
import jax
import jax.numpy as jnp
from jax import lax
from jax.experimental import pallas as pl
from jax.experimental.pallas import tpu as pltpu


KSIZE = 5
POOL = 2
FC_PAD = 128   # lane-dense width for the fused MLP


# ----------------------------- Pallas kernels -----------------------------

def _conv_relu_pool_kernel(p00_ref, p01_ref, p10_ref, p11_ref, w_ref, b_ref,
                           o_ref):
    """Fused conv (im2col matmul) + 2x2 max-pool + bias + relu.

    Each p*_ref is the im2col patch matrix for one position of the 2x2
    pooling window; pooling is the elementwise max of the four matmul
    results (all held in vregs).  Because the bias is shared across the four
    offsets and relu is monotone, bias + relu are applied once after the max."""
    w = w_ref[...]

    def mm(p_ref):
        return jnp.dot(p_ref[...], w, preferred_element_type=jnp.float32)

    m = jnp.maximum(jnp.maximum(mm(p00_ref), mm(p01_ref)),
                    jnp.maximum(mm(p10_ref), mm(p11_ref)))
    o_ref[...] = jnp.maximum(m + b_ref[...], 0.0).astype(o_ref.dtype)


def _mlp_kernel(x_ref, w1_ref, b1_ref, w2_ref, b2_ref, w3_ref, b3_ref, o_ref):
    """fc1+relu, fc2+relu, fc3 fused in one kernel (activations stay in vregs)."""
    h = jnp.dot(x_ref[...], w1_ref[...],
                preferred_element_type=jnp.float32) + b1_ref[...]
    h = jnp.maximum(h, 0.0)
    h = jnp.dot(h, w2_ref[...],
                preferred_element_type=jnp.float32) + b2_ref[...]
    h = jnp.maximum(h, 0.0)
    out = jnp.dot(h, w3_ref[...],
                  preferred_element_type=jnp.float32) + b3_ref[...]
    o_ref[...] = out.astype(o_ref.dtype)


# ----------------------------- pallas_call wrappers -----------------------------

def _full_spec(shape):
    return pl.BlockSpec(shape, lambda i: (0,) * len(shape))


def conv_relu_pool(patches, wmat, bias):
    """patches: list of 4 (M, k*k*Cin) im2col matrices (one per pool offset)."""
    M, Kp = patches[0].shape
    Cout = wmat.shape[1]
    return pl.pallas_call(
        _conv_relu_pool_kernel,
        out_shape=jax.ShapeDtypeStruct((M, Cout), patches[0].dtype),
        grid=(1,),
        in_specs=[_full_spec((M, Kp)) for _ in range(4)] + [
            _full_spec((Kp, Cout)),
            _full_spec((1, Cout)),
        ],
        out_specs=_full_spec((M, Cout)),
        compiler_params=pltpu.CompilerParams(
            dimension_semantics=("arbitrary",)),
    )(*patches, wmat, bias)


def fused_mlp(x, w1, b1, w2, b2, w3, b3):
    B, K = x.shape
    N = w3.shape[1]
    return pl.pallas_call(
        _mlp_kernel,
        out_shape=jax.ShapeDtypeStruct((B, N), x.dtype),
        grid=(1,),
        in_specs=[
            _full_spec((B, K)),
            _full_spec(w1.shape), _full_spec(b1.shape),
            _full_spec(w2.shape), _full_spec(b2.shape),
            _full_spec(w3.shape), _full_spec(b3.shape),
        ],
        out_specs=_full_spec((B, N)),
        compiler_params=pltpu.CompilerParams(
            dimension_semantics=("arbitrary",)),
    )(x, w1, b1, w2, b2, w3, b3)


# ----------------------------- layout plumbing (outside kernels) -----------------------------

def _pooled_patches(x_nhwc, ksize=KSIZE, pool=POOL):
    """Build one im2col matrix per 2x2-pool offset so conv+relu+pool can
    fuse into a single Pallas kernel.  Column order is (kh, kw, ci)."""
    B, H, W, C = x_nhwc.shape
    Ho, Wo = H - ksize + 1, W - ksize + 1
    Hp, Wp = Ho // pool, Wo // pool
    mats = []
    for qy in range(pool):
        for qx in range(pool):
            slabs = []
            for kh in range(ksize):
                for kw in range(ksize):
                    sy, sx = qy + kh, qx + kw
                    slab = x_nhwc[:, sy:sy + pool * Hp:pool,
                                  sx:sx + pool * Wp:pool, :]     # (B, Hp, Wp, C)
                    slabs.append(slab)
            patch = jnp.concatenate(slabs, axis=-1)              # (B, Hp, Wp, k*k*C)
            mats.append(patch.reshape(B * Hp * Wp, ksize * ksize * C))
    return mats, (Hp, Wp)


def prepare_params(params):
    """One-time conversion of torch-layout params to kernel-ready layout."""
    (cw1, cb1), (cw2, cb2), (fw1, fb1), (fw2, fb2), (fw3, fb3) = params

    def conv_mat(w):
        cout, cin, kh, kw = w.shape
        # (Cout, Cin, KH, KW) -> (KH, KW, Cin, Cout) -> (KH*KW*Cin, Cout)
        return jnp.transpose(w, (2, 3, 1, 0)).reshape(kh * kw * cin, cout)

    def pad_fc(wt, b, n_pad):
        k, n = wt.shape
        return (jnp.pad(wt, ((0, 0), (0, n_pad - n))),
                jnp.pad(b, (0, n_pad - n)).reshape(1, n_pad))

    def pad_fc_rows(wt, b, k_pad, n_pad):
        k, n = wt.shape
        return (jnp.pad(wt, ((0, k_pad - k), (0, n_pad - n))),
                jnp.pad(b, (0, n_pad - n)).reshape(1, n_pad))

    # Fold PyTorch's (C, H, W) flatten order into fc1's weight rows so the
    # conv2 output (rows already in (b, h, w) order, cols = channels) can feed
    # fc1 via a plain row-major reshape -- no activation transpose needed.
    c2 = cw2.shape[0]                           # 16 output channels of conv2
    p2 = fw1.shape[1] // c2                     # 5*5 spatial positions
    pos = jnp.arange(p2)
    chn = jnp.arange(c2)
    # new flat index n = pos*c2 + chn  <-  old torch index = chn*p2 + pos
    old_idx = (chn[None, :] * p2 + pos[:, None]).reshape(-1)
    w1_nhwc = jnp.take(fw1.T, old_idx, axis=0)  # (400, 120), rows in (h,w,c) order

    w1t, b1p = pad_fc(w1_nhwc, fb1, FC_PAD)                      # (400, 128)
    w2t, b2p = pad_fc_rows(fw2.T, fb2, FC_PAD, FC_PAD)           # (128, 128)
    w3t, b3p = pad_fc_rows(fw3.T, fb3, FC_PAD, FC_PAD)           # (128, 128)
    return dict(
        wc1=conv_mat(cw1), bc1=cb1.reshape(1, -1),
        wc2=conv_mat(cw2), bc2=cb2.reshape(1, -1),
        w1=w1t, b1=b1p, w2=w2t, b2=b2p, w3=w3t, b3=b3p,
    )


def lenet_forward(x_nchw, prep, n_classes=10):
    B = x_nchw.shape[0]
    x = jnp.transpose(x_nchw, (0, 2, 3, 1))                      # NHWC

    # conv1 + bias + relu + maxpool (one fused Pallas kernel)
    mats, (hp, wp) = _pooled_patches(x)
    y = conv_relu_pool(mats, prep["wc1"], prep["bc1"])           # (B*14*14, 6)
    x = y.reshape(B, hp, wp, prep["wc1"].shape[1])

    # conv2 + bias + relu + maxpool (one fused Pallas kernel)
    mats, (hp, wp) = _pooled_patches(x)
    y = conv_relu_pool(mats, prep["wc2"], prep["bc2"])           # (B*5*5, 16)

    # flatten: rows are already (b, h, w)-ordered, cols are channels -> a plain
    # row-major reshape gives (h, w, c) order, which fc1's permuted weights expect.
    x = y.reshape(B, -1)                                         # (B, 400)

    # fc1+relu, fc2+relu, fc3 fused in a single Pallas kernel (lane-padded)
    out = fused_mlp(x, prep["w1"], prep["b1"], prep["w2"], prep["b2"],
                    prep["w3"], prep["b3"])                      # (B, 128)
    return out[:, :n_classes]


# ----------------------------- pure-JAX reference -----------------------------

def lenet_reference(x, params):
    (cw1, cb1), (cw2, cb2), (fw1, fb1), (fw2, fb2), (fw3, fb3) = params

    def conv(x, w, b):
        y = lax.conv_general_dilated(
            x, w, window_strides=(1, 1), padding="VALID",
            dimension_numbers=("NCHW", "OIHW", "NCHW"),
            precision=lax.Precision.HIGHEST)
        return y + b.reshape(1, -1, 1, 1)

    def maxpool2(x):
        B, C, H, W = x.shape
        return x.reshape(B, C, H // 2, 2, W // 2, 2).max(axis=(3, 5))

    hi = lax.Precision.HIGHEST
    x = maxpool2(jnp.maximum(conv(x, cw1, cb1), 0.0))
    x = maxpool2(jnp.maximum(conv(x, cw2, cb2), 0.0))
    x = x.reshape(x.shape[0], -1)
    x = jnp.maximum(jnp.dot(x, fw1.T, precision=hi) + fb1, 0.0)
    x = jnp.maximum(jnp.dot(x, fw2.T, precision=hi) + fb2, 0.0)
    return jnp.dot(x, fw3.T, precision=hi) + fb3


# ----------------------------- init & main -----------------------------

def init_params(key):
    """Deterministic torch-default-style init (uniform +-1/sqrt(fan_in))."""
    def linear(k, fan_out, fan_in):
        kw, kb = jax.random.split(k)
        bound = 1.0 / jnp.sqrt(fan_in)
        w = jax.random.uniform(kw, (fan_out, fan_in), jnp.float32, -bound, bound)
        b = jax.random.uniform(kb, (fan_out,), jnp.float32, -bound, bound)
        return w, b

    def conv(k, cout, cin, ks):
        kw, kb = jax.random.split(k)
        bound = 1.0 / jnp.sqrt(cin * ks * ks)
        w = jax.random.uniform(kw, (cout, cin, ks, ks), jnp.float32, -bound, bound)
        b = jax.random.uniform(kb, (cout,), jnp.float32, -bound, bound)
        return w, b

    k1, k2, k3, k4, k5 = jax.random.split(key, 5)
    return [conv(k1, 6, 3, 5), conv(k2, 16, 6, 5),
            linear(k3, 120, 400), linear(k4, 84, 120), linear(k5, 10, 84)]


if __name__ == "__main__":
    key = jax.random.PRNGKey(0)
    key, kx = jax.random.split(key)

    batch = 2
    x = jax.random.normal(kx, (batch, 3, 32, 32), jnp.float32)   # LeNet 32x32 input

    params = init_params(key)
    prep = prepare_params(params)

    fwd = jax.jit(lenet_forward)
    out = jax.block_until_ready(fwd(x, prep))

    ref = lenet_reference(x, params)
    assert out.shape == (batch, 10)
    assert jnp.allclose(out, ref, atol=1e-4, rtol=1e-4), (
        "mismatch vs reference, max abs err = "
        f"{float(jnp.max(jnp.abs(out - ref))):.3e}")

    print("KERNEL_OK")
</pallas_src>

<mosaic_0001>
module attributes {stable_mosaic.version = 11 : i64} {
  func.func @_conv_relu_pool_kernel(%arg0: i32, %arg1: memref<392x75xf32, #tpu.memory_space<vmem>>, %arg2: memref<392x75xf32, #tpu.memory_space<vmem>>, %arg3: memref<392x75xf32, #tpu.memory_space<vmem>>, %arg4: memref<392x75xf32, #tpu.memory_space<vmem>>, %arg5: memref<75x6xf32, #tpu.memory_space<vmem>>, %arg6: memref<1x6xf32, #tpu.memory_space<vmem>>, %arg7: memref<392x6xf32, #tpu.memory_space<vmem>>) attributes {dimension_semantics = [#tpu.dimension_semantics<arbitrary>], iteration_bounds = array<i64: 1>, scalar_prefetch = 0 : i64, scratch_operands = 0 : i64, tpu.core_type = #tpu.core_type<tc>, window_params = [{pipeline_mode = #tpu.pipeline_mode<synchronous>, transform_indices = @transform_0, window_bounds = array<i64: 392, 75>}, {pipeline_mode = #tpu.pipeline_mode<synchronous>, transform_indices = @transform_1, window_bounds = array<i64: 392, 75>}, {pipeline_mode = #tpu.pipeline_mode<synchronous>, transform_indices = @transform_2, window_bounds = array<i64: 392, 75>}, {pipeline_mode = #tpu.pipeline_mode<synchronous>, transform_indices = @transform_3, window_bounds = array<i64: 392, 75>}, {pipeline_mode = #tpu.pipeline_mode<synchronous>, transform_indices = @transform_4, window_bounds = array<i64: 75, 6>}, {pipeline_mode = #tpu.pipeline_mode<synchronous>, transform_indices = @transform_5, window_bounds = array<i64: 1, 6>}, {pipeline_mode = #tpu.pipeline_mode<synchronous>, transform_indices = @transform_6, window_bounds = array<i64: 392, 6>}]} {
    %c0 = arith.constant 0 : index
    %c0_0 = arith.constant 0 : index
    %0 = vector.load %arg5[%c0, %c0_0] : memref<75x6xf32, #tpu.memory_space<vmem>>, vector<75x6xf32>
    %c0_1 = arith.constant 0 : index
    %c0_2 = arith.constant 0 : index
    %1 = vector.load %arg1[%c0_1, %c0_2] : memref<392x75xf32, #tpu.memory_space<vmem>>, vector<392x75xf32>
    %cst = arith.constant dense<0.000000e+00> : vector<392x6xf32>
    %2 = tpu.matmul %1, %0, %cst {dimension_numbers = #tpu.dot_dimension_numbers<[1], [0], [0], [1], [0, 0, 1, 1], [], []>} : vector<392x75xf32>, vector<75x6xf32>, vector<392x6xf32> -> vector<392x6xf32>
    %c0_3 = arith.constant 0 : index
    %c0_4 = arith.constant 0 : index
    %3 = vector.load %arg2[%c0_3, %c0_4] : memref<392x75xf32, #tpu.memory_space<vmem>>, vector<392x75xf32>
    %cst_5 = arith.constant dense<0.000000e+00> : vector<392x6xf32>
    %4 = tpu.matmul %3, %0, %cst_5 {dimension_numbers = #tpu.dot_dimension_numbers<[1], [0], [0], [1], [0, 0, 1, 1], [], []>} : vector<392x75xf32>, vector<75x6xf32>, vector<392x6xf32> -> vector<392x6xf32>
    %5 = arith.maximumf %2, %4 : vector<392x6xf32>
    %c0_6 = arith.constant 0 : index
    %c0_7 = arith.constant 0 : index
    %6 = vector.load %arg3[%c0_6, %c0_7] : memref<392x75xf32, #tpu.memory_space<vmem>>, vector<392x75xf32>
    %cst_8 = arith.constant dense<0.000000e+00> : vector<392x6xf32>
    %7 = tpu.matmul %6, %0, %cst_8 {dimension_numbers = #tpu.dot_dimension_numbers<[1], [0], [0], [1], [0, 0, 1, 1], [], []>} : vector<392x75xf32>, vector<75x6xf32>, vector<392x6xf32> -> vector<392x6xf32>
    %c0_9 = arith.constant 0 : index
    %c0_10 = arith.constant 0 : index
    %8 = vector.load %arg4[%c0_9, %c0_10] : memref<392x75xf32, #tpu.memory_space<vmem>>, vector<392x75xf32>
    %cst_11 = arith.constant dense<0.000000e+00> : vector<392x6xf32>
    %9 = tpu.matmul %8, %0, %cst_11 {dimension_numbers = #tpu.dot_dimension_numbers<[1], [0], [0], [1], [0, 0, 1, 1], [], []>} : vector<392x75xf32>, vector<75x6xf32>, vector<392x6xf32> -> vector<392x6xf32>
    %10 = arith.maximumf %7, %9 : vector<392x6xf32>
    %11 = arith.maximumf %5, %10 : vector<392x6xf32>
    %c0_12 = arith.constant 0 : index
    %c0_13 = arith.constant 0 : index
    %12 = vector.load %arg6[%c0_12, %c0_13] : memref<1x6xf32, #tpu.memory_space<vmem>>, vector<1x6xf32>
    %13 = vector.broadcast %12 : vector<1x6xf32> to vector<392x6xf32>
    %14 = arith.addf %11, %13 : vector<392x6xf32>
    %cst_14 = arith.constant 0.000000e+00 : f32
    %15 = vector.broadcast %cst_14 : f32 to vector<392x6xf32>
    %16 = arith.maximumf %14, %15 : vector<392x6xf32>
    %c0_15 = arith.constant 0 : index
    %c0_16 = arith.constant 0 : index
    %17 = vector.load %arg7[%c0_15, %c0_16] : memref<392x6xf32, #tpu.memory_space<vmem>>, vector<392x6xf32>
    tpu.vector_store %arg7[%c0_15, %c0_16], %16 {strides = array<i32>} : memref<392x6xf32, #tpu.memory_space<vmem>>, vector<392x6xf32>,
    return
  }
  func.func @transform_0(%arg0: i32) -> (i32, i32) {
    %c0_i32 = arith.constant 0 : i32
    %c0_i32_0 = arith.constant 0 : i32
    %c0_i32_1 = arith.constant 0 : i32
    return %c0_i32, %c0_i32_0 : i32, i32
  }
  func.func @transform_1(%arg0: i32) -> (i32, i32) {
    %c0_i32 = arith.constant 0 : i32
    %c0_i32_0 = arith.constant 0 : i32
    %c0_i32_1 = arith.constant 0 : i32
    return %c0_i32, %c0_i32_0 : i32, i32
  }
  func.func @transform_2(%arg0: i32) -> (i32, i32) {
    %c0_i32 = arith.constant 0 : i32
    %c0_i32_0 = arith.constant 0 : i32
    %c0_i32_1 = arith.constant 0 : i32
    return %c0_i32, %c0_i32_0 : i32, i32
  }
  func.func @transform_3(%arg0: i32) -> (i32, i32) {
    %c0_i32 = arith.constant 0 : i32
    %c0_i32_0 = arith.constant 0 : i32
    %c0_i32_1 = arith.constant 0 : i32
    return %c0_i32, %c0_i32_0 : i32, i32
  }
  func.func @transform_4(%arg0: i32) -> (i32, i32) {
    %c0_i32 = arith.constant 0 : i32
    %c0_i32_0 = arith.constant 0 : i32
    %c0_i32_1 = arith.constant 0 : i32
    return %c0_i32, %c0_i32_0 : i32, i32
  }
  func.func @transform_5(%arg0: i32) -> (i32, i32) {
    %c0_i32 = arith.constant 0 : i32
    %c0_i32_0 = arith.constant 0 : i32
    %c0_i32_1 = arith.constant 0 : i32
    return %c0_i32, %c0_i32_0 : i32, i32
  }
  func.func @transform_6(%arg0: i32) -> (i32, i32) {
    %c0_i32 = arith.constant 0 : i32
    %c0_i32_0 = arith.constant 0 : i32
    %c0_i32_1 = arith.constant 0 : i32
    return %c0_i32, %c0_i32_0 : i32, i32
  }
}

module attributes {stable_mosaic.version = 11 : i64} {
  func.func @_conv_relu_pool_kernel(%arg0: i32, %arg1: memref<50x150xf32, #tpu.memory_space<vmem>>, %arg2: memref<50x150xf32, #tpu.memory_space<vmem>>, %arg3: memref<50x150xf32, #tpu.memory_space<vmem>>, %arg4: memref<50x150xf32, #tpu.memory_space<vmem>>, %arg5: memref<150x16xf32, #tpu.memory_space<vmem>>, %arg6: memref<1x16xf32, #tpu.memory_space<vmem>>, %arg7: memref<50x16xf32, #tpu.memory_space<vmem>>) attributes {dimension_semantics = [#tpu.dimension_semantics<arbitrary>], iteration_bounds = array<i64: 1>, scalar_prefetch = 0 : i64, scratch_operands = 0 : i64, tpu.core_type = #tpu.core_type<tc>, window_params = [{pipeline_mode = #tpu.pipeline_mode<synchronous>, transform_indices = @transform_0, window_bounds = array<i64: 50, 150>}, {pipeline_mode = #tpu.pipeline_mode<synchronous>, transform_indices = @transform_1, window_bounds = array<i64: 50, 150>}, {pipeline_mode = #tpu.pipeline_mode<synchronous>, transform_indices = @transform_2, window_bounds = array<i64: 50, 150>}, {pipeline_mode = #tpu.pipeline_mode<synchronous>, transform_indices = @transform_3, window_bounds = array<i64: 50, 150>}, {pipeline_mode = #tpu.pipeline_mode<synchronous>, transform_indices = @transform_4, window_bounds = array<i64: 150, 16>}, {pipeline_mode = #tpu.pipeline_mode<synchronous>, transform_indices = @transform_5, window_bounds = array<i64: 1, 16>}, {pipeline_mode = #tpu.pipeline_mode<synchronous>, transform_indices = @transform_6, window_bounds = array<i64: 50, 16>}]} {
    %c0 = arith.constant 0 : index
    %c0_0 = arith.constant 0 : index
    %0 = vector.load %arg5[%c0, %c0_0] : memref<150x16xf32, #tpu.memory_space<vmem>>, vector<150x16xf32>
    %c0_1 = arith.constant 0 : index
    %c0_2 = arith.constant 0 : index
    %1 = vector.load %arg1[%c0_1, %c0_2] : memref<50x150xf32, #tpu.memory_space<vmem>>, vector<50x150xf32>
    %cst = arith.constant dense<0.000000e+00> : vector<50x16xf32>
    %2 = tpu.matmul %1, %0, %cst {dimension_numbers = #tpu.dot_dimension_numbers<[1], [0], [0], [1], [0, 0, 1, 1], [], []>} : vector<50x150xf32>, vector<150x16xf32>, vector<50x16xf32> -> vector<50x16xf32>
    %c0_3 = arith.constant 0 : index
    %c0_4 = arith.constant 0 : index
    %3 = vector.load %arg2[%c0_3, %c0_4] : memref<50x150xf32, #tpu.memory_space<vmem>>, vector<50x150xf32>
    %cst_5 = arith.constant dense<0.000000e+00> : vector<50x16xf32>
    %4 = tpu.matmul %3, %0, %cst_5 {dimension_numbers = #tpu.dot_dimension_numbers<[1], [0], [0], [1], [0, 0, 1, 1], [], []>} : vector<50x150xf32>, vector<150x16xf32>, vector<50x16xf32> -> vector<50x16xf32>
    %5 = arith.maximumf %2, %4 : vector<50x16xf32>
    %c0_6 = arith.constant 0 : index
    %c0_7 = arith.constant 0 : index
    %6 = vector.load %arg3[%c0_6, %c0_7] : memref<50x150xf32, #tpu.memory_space<vmem>>, vector<50x150xf32>
    %cst_8 = arith.constant dense<0.000000e+00> : vector<50x16xf32>
    %7 = tpu.matmul %6, %0, %cst_8 {dimension_numbers = #tpu.dot_dimension_numbers<[1], [0], [0], [1], [0, 0, 1, 1], [], []>} : vector<50x150xf32>, vector<150x16xf32>, vector<50x16xf32> -> vector<50x16xf32>
    %c0_9 = arith.constant 0 : index
    %c0_10 = arith.constant 0 : index
    %8 = vector.load %arg4[%c0_9, %c0_10] : memref<50x150xf32, #tpu.memory_space<vmem>>, vector<50x150xf32>
    %cst_11 = arith.constant dense<0.000000e+00> : vector<50x16xf32>
    %9 = tpu.matmul %8, %0, %cst_11 {dimension_numbers = #tpu.dot_dimension_numbers<[1], [0], [0], [1], [0, 0, 1, 1], [], []>} : vector<50x150xf32>, vector<150x16xf32>, vector<50x16xf32> -> vector<50x16xf32>
    %10 = arith.maximumf %7, %9 : vector<50x16xf32>
    %11 = arith.maximumf %5, %10 : vector<50x16xf32>
    %c0_12 = arith.constant 0 : index
    %c0_13 = arith.constant 0 : index
    %12 = vector.load %arg6[%c0_12, %c0_13] : memref<1x16xf32, #tpu.memory_space<vmem>>, vector<1x16xf32>
    %13 = vector.broadcast %12 : vector<1x16xf32> to vector<50x16xf32>
    %14 = arith.addf %11, %13 : vector<50x16xf32>
    %cst_14 = arith.constant 0.000000e+00 : f32
    %15 = vector.broadcast %cst_14 : f32 to vector<50x16xf32>
    %16 = arith.maximumf %14, %15 : vector<50x16xf32>
    %c0_15 = arith.constant 0 : index
    %c0_16 = arith.constant 0 : index
    %17 = vector.load %arg7[%c0_15, %c0_16] : memref<50x16xf32, #tpu.memory_space<vmem>>, vector<50x16xf32>
    tpu.vector_store %arg7[%c0_15, %c0_16], %16 {strides = array<i32>} : memref<50x16xf32, #tpu.memory_space<vmem>>, vector<50x16xf32>,
    return
  }
  func.func @transform_0(%arg0: i32) -> (i32, i32) {
    %c0_i32 = arith.constant 0 : i32
    %c0_i32_0 = arith.constant 0 : i32
    %c0_i32_1 = arith.constant 0 : i32
    return %c0_i32, %c0_i32_0 : i32, i32
  }
  func.func @transform_1(%arg0: i32) -> (i32, i32) {
    %c0_i32 = arith.constant 0 : i32
    %c0_i32_0 = arith.constant 0 : i32
    %c0_i32_1 = arith.constant 0 : i32
    return %c0_i32, %c0_i32_0 : i32, i32
  }
  func.func @transform_2(%arg0: i32) -> (i32, i32) {
    %c0_i32 = arith.constant 0 : i32
    %c0_i32_0 = arith.constant 0 : i32
    %c0_i32_1 = arith.constant 0 : i32
    return %c0_i32, %c0_i32_0 : i32, i32
  }
  func.func @transform_3(%arg0: i32) -> (i32, i32) {
    %c0_i32 = arith.constant 0 : i32
    %c0_i32_0 = arith.constant 0 : i32
    %c0_i32_1 = arith.constant 0 : i32
    return %c0_i32, %c0_i32_0 : i32, i32
  }
  func.func @transform_4(%arg0: i32) -> (i32, i32) {
    %c0_i32 = arith.constant 0 : i32
    %c0_i32_0 = arith.constant 0 : i32
    %c0_i32_1 = arith.constant 0 : i32
    return %c0_i32, %c0_i32_0 : i32, i32
  }
  func.func @transform_5(%arg0: i32) -> (i32, i32) {
    %c0_i32 = arith.constant 0 : i32
    %c0_i32_0 = arith.constant 0 : i32
    %c0_i32_1 = arith.constant 0 : i32
    return %c0_i32, %c0_i32_0 : i32, i32
  }
  func.func @transform_6(%arg0: i32) -> (i32, i32) {
    %c0_i32 = arith.constant 0 : i32
    %c0_i32_0 = arith.constant 0 : i32
    %c0_i32_1 = arith.constant 0 : i32
    return %c0_i32, %c0_i32_0 : i32, i32
  }
}

module attributes {stable_mosaic.version = 11 : i64} {
  func.func @_mlp_kernel(%arg0: i32, %arg1: memref<2x400xf32, #tpu.memory_space<vmem>>, %arg2: memref<400x128xf32, #tpu.memory_space<vmem>>, %arg3: memref<1x128xf32, #tpu.memory_space<vmem>>, %arg4: memref<128x128xf32, #tpu.memory_space<vmem>>, %arg5: memref<1x128xf32, #tpu.memory_space<vmem>>, %arg6: memref<128x128xf32, #tpu.memory_space<vmem>>, %arg7: memref<1x128xf32, #tpu.memory_space<vmem>>, %arg8: memref<2x128xf32, #tpu.memory_space<vmem>>) attributes {dimension_semantics = [#tpu.dimension_semantics<arbitrary>], iteration_bounds = array<i64: 1>, scalar_prefetch = 0 : i64, scratch_operands = 0 : i64, tpu.core_type = #tpu.core_type<tc>, window_params = [{pipeline_mode = #tpu.pipeline_mode<synchronous>, transform_indices = @transform_0, window_bounds = array<i64: 2, 400>}, {pipeline_mode = #tpu.pipeline_mode<synchronous>, transform_indices = @transform_1, window_bounds = array<i64: 400, 128>}, {pipeline_mode = #tpu.pipeline_mode<synchronous>, transform_indices = @transform_2, window_bounds = array<i64: 1, 128>}, {pipeline_mode = #tpu.pipeline_mode<synchronous>, transform_indices = @transform_3, window_bounds = array<i64: 128, 128>}, {pipeline_mode = #tpu.pipeline_mode<synchronous>, transform_indices = @transform_4, window_bounds = array<i64: 1, 128>}, {pipeline_mode = #tpu.pipeline_mode<synchronous>, transform_indices = @transform_5, window_bounds = array<i64: 128, 128>}, {pipeline_mode = #tpu.pipeline_mode<synchronous>, transform_indices = @transform_6, window_bounds = array<i64: 1, 128>}, {pipeline_mode = #tpu.pipeline_mode<synchronous>, transform_indices = @transform_7, window_bounds = array<i64: 2, 128>}]} {
    %c0 = arith.constant 0 : index
    %c0_0 = arith.constant 0 : index
    %0 = vector.load %arg1[%c0, %c0_0] : memref<2x400xf32, #tpu.memory_space<vmem>>, vector<2x400xf32>
    %c0_1 = arith.constant 0 : index
    %c0_2 = arith.constant 0 : index
    %1 = vector.load %arg2[%c0_1, %c0_2] : memref<400x128xf32, #tpu.memory_space<vmem>>, vector<400x128xf32>
    %cst = arith.constant dense<0.000000e+00> : vector<2x128xf32>
    %2 = tpu.matmul %0, %1, %cst {dimension_numbers = #tpu.dot_dimension_numbers<[1], [0], [0], [1], [0, 0, 1, 1], [], []>} : vector<2x400xf32>, vector<400x128xf32>, vector<2x128xf32> -> vector<2x128xf32>
    %c0_3 = arith.constant 0 : index
    %c0_4 = arith.constant 0 : index
    %3 = vector.load %arg3[%c0_3, %c0_4] : memref<1x128xf32, #tpu.memory_space<vmem>>, vector<1x128xf32>
    %4 = vector.broadcast %3 : vector<1x128xf32> to vector<2x128xf32>
    %5 = arith.addf %2, %4 : vector<2x128xf32>
    %cst_5 = arith.constant 0.000000e+00 : f32
    %6 = vector.broadcast %cst_5 : f32 to vector<2x128xf32>
    %7 = arith.maximumf %5, %6 : vector<2x128xf32>
    %c0_6 = arith.constant 0 : index
    %c0_7 = arith.constant 0 : index
    %8 = vector.load %arg4[%c0_6, %c0_7] : memref<128x128xf32, #tpu.memory_space<vmem>>, vector<128x128xf32>
    %cst_8 = arith.constant dense<0.000000e+00> : vector<2x128xf32>
    %9 = tpu.matmul %7, %8, %cst_8 {dimension_numbers = #tpu.dot_dimension_numbers<[1], [0], [0], [1], [0, 0, 1, 1], [], []>} : vector<2x128xf32>, vector<128x128xf32>, vector<2x128xf32> -> vector<2x128xf32>
    %c0_9 = arith.constant 0 : index
    %c0_10 = arith.constant 0 : index
    %10 = vector.load %arg5[%c0_9, %c0_10] : memref<1x128xf32, #tpu.memory_space<vmem>>, vector<1x128xf32>
    %11 = vector.broadcast %10 : vector<1x128xf32> to vector<2x128xf32>
    %12 = arith.addf %9, %11 : vector<2x128xf32>
    %cst_11 = arith.constant 0.000000e+00 : f32
    %13 = vector.broadcast %cst_11 : f32 to vector<2x128xf32>
    %14 = arith.maximumf %12, %13 : vector<2x128xf32>
    %c0_12 = arith.constant 0 : index
    %c0_13 = arith.constant 0 : index
    %15 = vector.load %arg6[%c0_12, %c0_13] : memref<128x128xf32, #tpu.memory_space<vmem>>, vector<128x128xf32>
    %cst_14 = arith.constant dense<0.000000e+00> : vector<2x128xf32>
    %16 = tpu.matmul %14, %15, %cst_14 {dimension_numbers = #tpu.dot_dimension_numbers<[1], [0], [0], [1], [0, 0, 1, 1], [], []>} : vector<2x128xf32>, vector<128x128xf32>, vector<2x128xf32> -> vector<2x128xf32>
    %c0_15 = arith.constant 0 : index
    %c0_16 = arith.constant 0 : index
    %17 = vector.load %arg7[%c0_15, %c0_16] : memref<1x128xf32, #tpu.memory_space<vmem>>, vector<1x128xf32>
    %18 = vector.broadcast %17 : vector<1x128xf32> to vector<2x128xf32>
    %19 = arith.addf %16, %18 : vector<2x128xf32>
    %c0_17 = arith.constant 0 : index
    %c0_18 = arith.constant 0 : index
    %20 = vector.load %arg8[%c0_17, %c0_18] : memref<2x128xf32, #tpu.memory_space<vmem>>, vector<2x128xf32>
    tpu.vector_store %arg8[%c0_17, %c0_18], %19 {strides = array<i32>} : memref<2x128xf32, #tpu.memory_space<vmem>>, vector<2x128xf32>,
    return
  }
  func.func @transform_0(%arg0: i32) -> (i32, i32) {
    %c0_i32 = arith.constant 0 : i32
    %c0_i32_0 = arith.constant 0 : i32
    %c0_i32_1 = arith.constant 0 : i32
    return %c0_i32, %c0_i32_0 : i32, i32
  }
  func.func @transform_1(%arg0: i32) -> (i32, i32) {
    %c0_i32 = arith.constant 0 : i32
    %c0_i32_0 = arith.constant 0 : i32
    %c0_i32_1 = arith.constant 0 : i32
    return %c0_i32, %c0_i32_0 : i32, i32
  }
  func.func @transform_2(%arg0: i32) -> (i32, i32) {
    %c0_i32 = arith.constant 0 : i32
    %c0_i32_0 = arith.constant 0 : i32
    %c0_i32_1 = arith.constant 0 : i32
    return %c0_i32, %c0_i32_0 : i32, i32
  }
  func.func @transform_3(%arg0: i32) -> (i32, i32) {
    %c0_i32 = arith.constant 0 : i32
    %c0_i32_0 = arith.constant 0 : i32
    %c0_i32_1 = arith.constant 0 : i32
    return %c0_i32, %c0_i32_0 : i32, i32
  }
  func.func @transform_4(%arg0: i32) -> (i32, i32) {
    %c0_i32 = arith.constant 0 : i32
    %c0_i32_0 = arith.constant 0 : i32
    %c0_i32_1 = arith.constant 0 : i32
    return %c0_i32, %c0_i32_0 : i32, i32
  }
  func.func @transform_5(%arg0: i32) -> (i32, i32) {
    %c0_i32 = arith.constant 0 : i32
    %c0_i32_0 = arith.constant 0 : i32
    %c0_i32_1 = arith.constant 0 : i32
    return %c0_i32, %c0_i32_0 : i32, i32
  }
  func.func @transform_6(%arg0: i32) -> (i32, i32) {
    %c0_i32 = arith.constant 0 : i32
    %c0_i32_0 = arith.constant 0 : i32
    %c0_i32_1 = arith.constant 0 : i32
    return %c0_i32, %c0_i32_0 : i32, i32
  }
  func.func @transform_7(%arg0: i32) -> (i32, i32) {
    %c0_i32 = arith.constant 0 : i32
    %c0_i32_0 = arith.constant 0 : i32
    %c0_i32_1 = arith.constant 0 : i32
    return %c0_i32, %c0_i32_0 : i32, i32
  }
}

</mosaic_0001>

<llo_original>
// kernel: lenet_forward.3
$region0: #{lenet_forward.3}
  #allocation0 [shape = 'u32[]', space=smem, size = 0x4, offset = 0x4, fixed_abs, tag = 'smem constant byte address 0x4 - core index']
  #allocation1 [shape = 'u32[72,128]{1,0:T(1,128)}', space=vmem, size = 0x9000, scoped, tag = 'internal scratch']
  %s0 = inlined_call_operand.vmem [shape: f32[392,75], index: 0, kind: input, shape index: {}]
  %s1 = inlined_call_operand.vmem [shape: f32[392,75], index: 1, kind: input, shape index: {}]
  %s2 = inlined_call_operand.vmem [shape: f32[392,75], index: 2, kind: input, shape index: {}]
  %s3 = inlined_call_operand.vmem [shape: f32[392,75], index: 3, kind: input, shape index: {}]
  %s4 = inlined_call_operand.vmem [shape: f32[75,6], index: 4, kind: input, shape index: {}]
  %s5 = inlined_call_operand.vmem [shape: f32[1,6], index: 5, kind: input, shape index: {}]
  %s6 = inlined_call_operand.vmem [shape: f32[392,6], index: 6, kind: output, shape index: {}]
  %s7 = sld [smem:[#allocation0]]
  $region34: #{lenet_forward.3} parent=0
    _
  %s9 = ssub.s32 1, %s7
  %s10 = scalar_select 0, %s9, %s7
  // Predicated region
  $region2: #{lenet_forward.3} parent=0 // pred_check
    _
  $region3: #{lenet_forward.3} parent=0 // pred_check_branch
    %12 = sbr.rel (0) target = $region5
  $region4: #{lenet_forward.3} parent=0 // pred_region
    _
  $region5: #{lenet_forward.3} parent=0 // pred_fallthru
    _
  // Predicated region
  $region6: #{lenet_forward.3} parent=0 // pred_check
    _
  $region7: #{lenet_forward.3} parent=0 // pred_check_branch
    %14 = sbr.rel (0) target = $region9
  $region8: #{lenet_forward.3} parent=0 // pred_region
    _
  $region9: #{lenet_forward.3} parent=0 // pred_fallthru
    _
  // Predicated region
  $region10: #{lenet_forward.3} parent=0 // pred_check
    _
  $region11: #{lenet_forward.3} parent=0 // pred_check_branch
    %16 = sbr.rel (0) target = $region13
  $region12: #{lenet_forward.3} parent=0 // pred_region
    _
  $region13: #{lenet_forward.3} parent=0 // pred_fallthru
    _
  // Predicated region
  $region14: #{lenet_forward.3} parent=0 // pred_check
    _
  $region15: #{lenet_forward.3} parent=0 // pred_check_branch
    %18 = sbr.rel (0) target = $region17
  $region16: #{lenet_forward.3} parent=0 // pred_region
    _
  $region17: #{lenet_forward.3} parent=0 // pred_fallthru
    _
  // Predicated region
  $region18: #{lenet_forward.3} parent=0 // pred_check
    _
  $region19: #{lenet_forward.3} parent=0 // pred_check_branch
    %20 = sbr.rel (0) target = $region21
  $region20: #{lenet_forward.3} parent=0 // pred_region
    _
  $region21: #{lenet_forward.3} parent=0 // pred_fallthru
    _
  // Predicated region
  $region22: #{lenet_forward.3} parent=0 // pred_check
    _
  $region23: #{lenet_forward.3} parent=0 // pred_check_branch
    %22 = sbr.rel (0) target = $region25
  $region24: #{lenet_forward.3} parent=0 // pred_region
    _
  $region25: #{lenet_forward.3} parent=0 // pred_fallthru
    _
  %v23 = vld [vmem:[%s4] sm:$0xff]
  %v24 = vld [vmem:[%s4 + $0x8] sm:$0xff]
  %v25 = vld [vmem:[%s4 + $0x10] sm:$0xff]
  %v26 = vld [vmem:[%s4 + $0x18] sm:$0xff]
  %v27 = vld [vmem:[%s4 + $0x20] sm:$0xff]
  %v28 = vld [vmem:[%s4 + $0x28] sm:$0xff]
  %v29 = vld [vmem:[%s4 + $0x30] sm:$0xff]
  %v30 = vld [vmem:[%s4 + $0x38] sm:$0xff]
  %v31 = vld [vmem:[%s4 + $0x40] sm:$0xff]
  %v32 = vld [vmem:[%s4 + $0x48] sm:$0x7]
  %v33 = vld [vmem:[%s0] sm:$0xff]
  %v34 = vld [vmem:[%s0 + $0x8] sm:$0xff]
  %v35 = vld [vmem:[%s0 + $0x10] sm:$0xff]
  %v36 = vld [vmem:[%s0 + $0x18] sm:$0xff]
  %v37 = vld [vmem:[%s0 + $0x20] sm:$0xff]
  %v38 = vld [vmem:[%s0 + $0x28] sm:$0xff]
  %v39 = vld [vmem:[%s0 + $0x30] sm:$0xff]
  %v40 = vld [vmem:[%s0 + $0x38] sm:$0xff]
  %v41 = vld [vmem:[%s0 + $0x40] sm:$0xff]
  %v42 = vld [vmem:[%s0 + $0x48] sm:$0xff]
  %v43 = vld [vmem:[%s0 + $0x50] sm:$0xff]
  %v44 = vld [vmem:[%s0 + $0x58] sm:$0xff]
  %v45 = vld [vmem:[%s0 + $0x60] sm:$0xff]
  %v46 = vld [vmem:[%s0 + $0x68] sm:$0xff]
  %v47 = vld [vmem:[%s0 + $0x70] sm:$0xff]
  %v48 = vld [vmem:[%s0 + $0x78] sm:$0xff]
  %v49 = vld [vmem:[%s0 + $0x80] sm:$0xff]
  %v50 = vld [vmem:[%s0 + $0x88] sm:$0xff]
  %v51 = vld [vmem:[%s0 + $0x90] sm:$0xff]
  %v52 = vld [vmem:[%s0 + $0x98] sm:$0xff]
  %v53 = vld [vmem:[%s0 + $0xa0] sm:$0xff]
  %v54 = vld [vmem:[%s0 + $0xa8] sm:$0xff]
  %v55 = vld [vmem:[%s0 + $0xb0] sm:$0xff]
  %v56 = vld [vmem:[%s0 + $0xb8] sm:$0xff]
  %v57 = vld [vmem:[%s0 + $0xc0] sm:$0xff]
  %v58 = vld [vmem:[%s0 + $0xc8] sm:$0xff]
  %v59 = vld [vmem:[%s0 + $0xd0] sm:$0xff]
  %v60 = vld [vmem:[%s0 + $0xd8] sm:$0xff]
  %v61 = vld [vmem:[%s0 + $0xe0] sm:$0xff]
  %v62 = vld [vmem:[%s0 + $0xe8] sm:$0xff]
  %v63 = vld [vmem:[%s0 + $0xf0] sm:$0xff]
  %v64 = vld [vmem:[%s0 + $0xf8] sm:$0xff]
  %v65 = vld [vmem:[%s0 + $0x100] sm:$0xff]
  %v66 = vld [vmem:[%s0 + $0x108] sm:$0xff]
  %v67 = vld [vmem:[%s0 + $0x110] sm:$0xff]
  %v68 = vld [vmem:[%s0 + $0x118] sm:$0xff]
  %v69 = vld [vmem:[%s0 + $0x120] sm:$0xff]
  %v70 = vld [vmem:[%s0 + $0x128] sm:$0xff]
  %v71 = vld [vmem:[%s0 + $0x130] sm:$0xff]
  %v72 = vld [vmem:[%s0 + $0x138] sm:$0xff]
  %v73 = vld [vmem:[%s0 + $0x140] sm:$0xff]
  %v74 = vld [vmem:[%s0 + $0x148] sm:$0xff]
  %v75 = vld [vmem:[%s0 + $0x150] sm:$0xff]
  %v76 = vld [vmem:[%s0 + $0x158] sm:$0xff]
  %v77 = vld [vmem:[%s0 + $0x160] sm:$0xff]
  %v78 = vld [vmem:[%s0 + $0x168] sm:$0xff]
  %v79 = vld [vmem:[%s0 + $0x170] sm:$0xff]
  %v80 = vld [vmem:[%s0 + $0x178] sm:$0xff]
  %v81 = vld [vmem:[%s0 + $0x180] sm:$0xff]
  %vm82 = vcmask 613376
  %v84 = vsel %vm82, %v33, 0
  %v87 = vsel %vm82, %v34, 0
  %v90 = vsel %vm82, %v35, 0
  %v93 = vsel %vm82, %v36, 0
  %v96 = vsel %vm82, %v37, 0
  %v99 = vsel %vm82, %v38, 0
  %v102 = vsel %vm82, %v39, 0
  %v105 = vsel %vm82, %v40, 0
  %v108 = vsel %vm82, %v41, 0
  %v111 = vsel %vm82, %v42, 0
  %v114 = vsel %vm82, %v43, 0
  %v117 = vsel %vm82, %v44, 0
  %v120 = vsel %vm82, %v45, 0
  %v123 = vsel %vm82, %v46, 0
  %v126 = vsel %vm82, %v47, 0
  %v129 = vsel %vm82, %v48, 0
  %v132 = vsel %vm82, %v49, 0
  %v135 = vsel %vm82, %v50, 0
  %v138 = vsel %vm82, %v51, 0
  %v141 = vsel %vm82, %v52, 0
  %v144 = vsel %vm82, %v53, 0
  %v147 = vsel %vm82, %v54, 0
  %v150 = vsel %vm82, %v55, 0
  %v153 = vsel %vm82, %v56, 0
  %v156 = vsel %vm82, %v57, 0
  %v159 = vsel %vm82, %v58, 0
  %v162 = vsel %vm82, %v59, 0
  %v165 = vsel %vm82, %v60, 0
  %v168 = vsel %vm82, %v61, 0
  %v171 = vsel %vm82, %v62, 0
  %v174 = vsel %vm82, %v63, 0
  %v177 = vsel %vm82, %v64, 0
  %v180 = vsel %vm82, %v65, 0
  %v183 = vsel %vm82, %v66, 0
  %v186 = vsel %vm82, %v67, 0
  %v189 = vsel %vm82, %v68, 0
  %v192 = vsel %vm82, %v69, 0
  %v195 = vsel %vm82, %v70, 0
  %v198 = vsel %vm82, %v71, 0
  %v201 = vsel %vm82, %v72, 0
  %v204 = vsel %vm82, %v73, 0
  %v207 = vsel %vm82, %v74, 0
  %v210 = vsel %vm82, %v75, 0
  %v213 = vsel %vm82, %v76, 0
  %v216 = vsel %vm82, %v77, 0
  %v219 = vsel %vm82, %v78, 0
  %v222 = vsel %vm82, %v79, 0
  %v225 = vsel %vm82, %v80, 0
  %v228 = vsel %vm82, %v81, 0
  %vm230 = vcmask 1042432
  %v232 = vsel %vm230, %v32, 0
  %234 = vmatpush.msra.mxu0 0.0
  %235 = vmatpush.msra.mxu0 0.0
  %236 = vmatpush.msra.mxu0 0.0
  %237 = vmatpush.msra.mxu0 0.0
  %238 = vmatpush.msra.mxu0 0.0
  %239 = vmatpush.msra.mxu0 0.0
  %240 = vmatpush.msra.mxu0 %v232
  %241 = vmatpush.msra.mxu0 %v31
  %242 = vmatpush.msra.mxu0 %v30
  %243 = vmatpush.msra.mxu0 %v29
  %244 = vmatpush.msra.mxu0 %v28
  %245 = vmatpush.msra.mxu0 %v27
  %246 = vmatpush.msra.mxu0 %v26
  %247 = vmatpush.msra.mxu0 %v25
  %248 = vmatpush.msra.mxu0 %v24
  %249 = vmatpush.msra.mxu0 %v23
  %250 = vmatmul.f32.gmra.mxu0 %v84
  %v251 = vpop.f32.mrf.mxu0
  %v252 = vadd.f32 0.0, %v251
  %253 = vmatmul.f32.gmra.mxu0 %v87
  %v254 = vpop.f32.mrf.mxu0
  %v255 = vadd.f32 0.0, %v254
  %256 = vmatmul.f32.gmra.mxu0 %v90
  %v257 = vpop.f32.mrf.mxu0
  %v258 = vadd.f32 0.0, %v257
  %259 = vmatmul.f32.gmra.mxu0 %v93
  %v260 = vpop.f32.mrf.mxu0
  %v261 = vadd.f32 0.0, %v260
  %262 = vmatmul.f32.gmra.mxu0 %v96
  %v263 = vpop.f32.mrf.mxu0
  %v264 = vadd.f32 0.0, %v263
  %265 = vmatmul.f32.gmra.mxu0 %v99
  %v266 = vpop.f32.mrf.mxu0
  %v267 = vadd.f32 0.0, %v266
  %268 = vmatmul.f32.gmra.mxu0 %v102
  %v269 = vpop.f32.mrf.mxu0
  %v270 = vadd.f32 0.0, %v269
  %271 = vmatmul.f32.gmra.mxu0 %v105
  %v272 = vpop.f32.mrf.mxu0
  %v273 = vadd.f32 0.0, %v272
  %274 = vmatmul.f32.gmra.mxu0 %v108
  %v275 = vpop.f32.mrf.mxu0
  %v276 = vadd.f32 0.0, %v275
  %277 = vmatmul.f32.gmra.mxu0 %v111
  %v278 = vpop.f32.mrf.mxu0
  %v279 = vadd.f32 0.0, %v278
  %280 = vmatmul.f32.gmra.mxu0 %v114
  %v281 = vpop.f32.mrf.mxu0
  %v282 = vadd.f32 0.0, %v281
  %283 = vmatmul.f32.gmra.mxu0 %v117
  %v284 = vpop.f32.mrf.mxu0
  %v285 = vadd.f32 0.0, %v284
  %286 = vmatmul.f32.gmra.mxu0 %v120
  %v287 = vpop.f32.mrf.mxu0
  %v288 = vadd.f32 0.0, %v287
  %289 = vmatmul.f32.gmra.mxu0 %v123
  %v290 = vpop.f32.mrf.mxu0
  %v291 = vadd.f32 0.0, %v290
  %292 = vmatmul.f32.gmra.mxu0 %v126
  %v293 = vpop.f32.mrf.mxu0
  %v294 = vadd.f32 0.0, %v293
  %295 = vmatmul.f32.gmra.mxu0 %v129
  %v296 = vpop.f32.mrf.mxu0
  %v297 = vadd.f32 0.0, %v296
  %298 = vmatmul.f32.gmra.mxu0 %v132
  %v299 = vpop.f32.mrf.mxu0
  %v300 = vadd.f32 0.0, %v299
  %301 = vmatmul.f32.gmra.mxu0 %v135
  %v302 = vpop.f32.mrf.mxu0
  %v303 = vadd.f32 0.0, %v302
  %304 = vmatmul.f32.gmra.mxu0 %v138
  %v305 = vpop.f32.mrf.mxu0
  %v306 = vadd.f32 0.0, %v305
  %307 = vmatmul.f32.gmra.mxu0 %v141
  %v308 = vpop.f32.mrf.mxu0
  %v309 = vadd.f32 0.0, %v308
  %310 = vmatmul.f32.gmra.mxu0 %v144
  %v311 = vpop.f32.mrf.mxu0
  %v312 = vadd.f32 0.0, %v311
  %313 = vmatmul.f32.gmra.mxu0 %v147
  %v314 = vpop.f32.mrf.mxu0
  %v315 = vadd.f32 0.0, %v314
  %316 = vmatmul.f32.gmra.mxu0 %v150
  %v317 = vpop.f32.mrf.mxu0
  %v318 = vadd.f32 0.0, %v317
  %319 = vmatmul.f32.gmra.mxu0 %v153
  %v320 = vpop.f32.mrf.mxu0
  %v321 = vadd.f32 0.0, %v320
  %322 = vmatmul.f32.gmra.mxu0 %v156
  %v323 = vpop.f32.mrf.mxu0
  %v324 = vadd.f32 0.0, %v323
  %325 = vmatmul.f32.gmra.mxu0 %v159
  %v326 = vpop.f32.mrf.mxu0
  %v327 = vadd.f32 0.0, %v326
  %328 = vmatmul.f32.gmra.mxu0 %v162
  %v329 = vpop.f32.mrf.mxu0
  %v330 = vadd.f32 0.0, %v329
  %331 = vmatmul.f32.gmra.mxu0 %v165
  %v332 = vpop.f32.mrf.mxu0
  %v333 = vadd.f32 0.0, %v332
  %334 = vmatmul.f32.gmra.mxu0 %v168
  %v335 = vpop.f32.mrf.mxu0
  %v336 = vadd.f32 0.0, %v335
  %337 = vmatmul.f32.gmra.mxu0 %v171
  %v338 = vpop.f32.mrf.mxu0
  %v339 = vadd.f32 0.0, %v338
  %340 = vmatmul.f32.gmra.mxu0 %v174
  %v341 = vpop.f32.mrf.mxu0
  %v342 = vadd.f32 0.0, %v341
  %343 = vmatmul.f32.gmra.mxu0 %v177
  %v344 = vpop.f32.mrf.mxu0
  %v345 = vadd.f32 0.0, %v344
  %346 = vmatmul.f32.gmra.mxu0 %v180
  %v347 = vpop.f32.mrf.mxu0
  %v348 = vadd.f32 0.0, %v347
  %349 = vmatmul.f32.gmra.mxu0 %v183
  %v350 = vpop.f32.mrf.mxu0
  %v351 = vadd.f32 0.0, %v350
  %352 = vmatmul.f32.gmra.mxu0 %v186
  %v353 = vpop.f32.mrf.mxu0
  %v354 = vadd.f32 0.0, %v353
  %355 = vmatmul.f32.gmra.mxu0 %v189
  %v356 = vpop.f32.mrf.mxu0
  %v357 = vadd.f32 0.0, %v356
  %358 = vmatmul.f32.gmra.mxu0 %v192
  %v359 = vpop.f32.mrf.mxu0
  %v360 = vadd.f32 0.0, %v359
  %361 = vmatmul.f32.gmra.mxu0 %v195
  %v362 = vpop.f32.mrf.mxu0
  %v363 = vadd.f32 0.0, %v362
  %364 = vmatmul.f32.gmra.mxu0 %v198
  %v365 = vpop.f32.mrf.mxu0
  %v366 = vadd.f32 0.0, %v365
  %367 = vmatmul.f32.gmra.mxu0 %v201
  %v368 = vpop.f32.mrf.mxu0
  %v369 = vadd.f32 0.0, %v368
  %370 = vmatmul.f32.gmra.mxu0 %v204
  %v371 = vpop.f32.mrf.mxu0
  %v372 = vadd.f32 0.0, %v371
  %373 = vmatmul.f32.gmra.mxu0 %v207
  %v374 = vpop.f32.mrf.mxu0
  %v375 = vadd.f32 0.0, %v374
  %376 = vmatmul.f32.gmra.mxu0 %v210
  %v377 = vpop.f32.mrf.mxu0
  %v378 = vadd.f32 0.0, %v377
  %379 = vmatmul.f32.gmra.mxu0 %v213
  %v380 = vpop.f32.mrf.mxu0
  %v381 = vadd.f32 0.0, %v380
  %382 = vmatmul.f32.gmra.mxu0 %v216
  %v383 = vpop.f32.mrf.mxu0
  %v384 = vadd.f32 0.0, %v383
  %385 = vmatmul.f32.gmra.mxu0 %v219
  %v386 = vpop.f32.mrf.mxu0
  %v387 = vadd.f32 0.0, %v386
  %388 = vmatmul.f32.gmra.mxu0 %v222
  %v389 = vpop.f32.mrf.mxu0
  %v390 = vadd.f32 0.0, %v389
  %391 = vmatmul.f32.gmra.mxu0 %v225
  %v392 = vpop.f32.mrf.mxu0
  %v393 = vadd.f32 0.0, %v392
  %394 = vmatmul.f32.gmra.mxu0 %v228
  %v395 = vpop.f32.mrf.mxu0
  %v396 = vadd.f32 0.0, %v395
  %397 = vdwg.mxu0
  %v398 = vld [vmem:[%s1] sm:$0xff]
  %v399 = vld [vmem:[%s1 + $0x8] sm:$0xff]
  %v400 = vld [vmem:[%s1 + $0x10] sm:$0xff]
  %v401 = vld [vmem:[%s1 + $0x18] sm:$0xff]
  %v402 = vld [vmem:[%s1 + $0x20] sm:$0xff]
  %v403 = vld [vmem:[%s1 + $0x28] sm:$0xff]
  %v404 = vld [vmem:[%s1 + $0x30] sm:$0xff]
  %v405 = vld [vmem:[%s1 + $0x38] sm:$0xff]
  %v406 = vld [vmem:[%s1 + $0x40] sm:$0xff]
  %v407 = vld [vmem:[%s1 + $0x48] sm:$0xff]
  %v408 = vld [vmem:[%s1 + $0x50] sm:$0xff]
  %v409 = vld [vmem:[%s1 + $0x58] sm:$0xff]
  %v410 = vld [vmem:[%s1 + $0x60] sm:$0xff]
  %v411 = vld [vmem:[%s1 + $0x68] sm:$0xff]
  %v412 = vld [vmem:[%s1 + $0x70] sm:$0xff]
  %v413 = vld [vmem:[%s1 + $0x78] sm:$0xff]
  %v414 = vld [vmem:[%s1 + $0x80] sm:$0xff]
  %v415 = vld [vmem:[%s1 + $0x88] sm:$0xff]
  %v416 = vld [vmem:[%s1 + $0x90] sm:$0xff]
  %v417 = vld [vmem:[%s1 + $0x98] sm:$0xff]
  %v418 = vld [vmem:[%s1 + $0xa0] sm:$0xff]
  %v419 = vld [vmem:[%s1 + $0xa8] sm:$0xff]
  %v420 = vld [vmem:[%s1 + $0xb0] sm:$0xff]
  %v421 = vld [vmem:[%s1 + $0xb8] sm:$0xff]
  %v422 = vld [vmem:[%s1 + $0xc0] sm:$0xff]
  %v423 = vld [vmem:[%s1 + $0xc8] sm:$0xff]
  %v424 = vld [vmem:[%s1 + $0xd0] sm:$0xff]
  %v425 = vld [vmem:[%s1 + $0xd8] sm:$0xff]
  %v426 = vld [vmem:[%s1 + $0xe0] sm:$0xff]
  %v427 = vld [vmem:[%s1 + $0xe8] sm:$0xff]
  %v428 = vld [vmem:[%s1 + $0xf0] sm:$0xff]
  %v429 = vld [vmem:[%s1 + $0xf8] sm:$0xff]
  %v430 = vld [vmem:[%s1 + $0x100] sm:$0xff]
  %v431 = vld [vmem:[%s1 + $0x108] sm:$0xff]
  %v432 = vld [vmem:[%s1 + $0x110] sm:$0xff]
  %v433 = vld [vmem:[%s1 + $0x118] sm:$0xff]
  %v434 = vld [vmem:[%s1 + $0x120] sm:$0xff]
  %v435 = vld [vmem:[%s1 + $0x128] sm:$0xff]
  %v436 = vld [vmem:[%s1 + $0x130] sm:$0xff]
  %v437 = vld [vmem:[%s1 + $0x138] sm:$0xff]
  %v438 = vld [vmem:[%s1 + $0x140] sm:$0xff]
  %v439 = vld [vmem:[%s1 + $0x148] sm:$0xff]
  %v440 = vld [vmem:[%s1 + $0x150] sm:$0xff]
  %v441 = vld [vmem:[%s1 + $0x158] sm:$0xff]
  %v442 = vld [vmem:[%s1 + $0x160] sm:$0xff]
  %v443 = vld [vmem:[%s1 + $0x168] sm:$0xff]
  %v444 = vld [vmem:[%s1 + $0x170] sm:$0xff]
  %v445 = vld [vmem:[%s1 + $0x178] sm:$0xff]
  %v446 = vld [vmem:[%s1 + $0x180] sm:$0xff]
  %v448 = vsel %vm82, %v398, 0
  %v451 = vsel %vm82, %v399, 0
  %v454 = vsel %vm82, %v400, 0
  %v457 = vsel %vm82, %v401, 0
  %v460 = vsel %vm82, %v402, 0
  %v463 = vsel %vm82, %v403, 0
  %v466 = vsel %vm82, %v404, 0
  %v469 = vsel %vm82, %v405, 0
  %v472 = vsel %vm82, %v406, 0
  %v475 = vsel %vm82, %v407, 0
  %v478 = vsel %vm82, %v408, 0
  %v481 = vsel %vm82, %v409, 0
  %v484 = vsel %vm82, %v410, 0
  %v487 = vsel %vm82, %v411, 0
  %v490 = vsel %vm82, %v412, 0
  %v493 = vsel %vm82, %v413, 0
  %v496 = vsel %vm82, %v414, 0
  %v499 = vsel %vm82, %v415, 0
  %v502 = vsel %vm82, %v416, 0
  %v505 = vsel %vm82, %v417, 0
  %v508 = vsel %vm82, %v418, 0
  %v511 = vsel %vm82, %v419, 0
  %v514 = vsel %vm82, %v420, 0
  %v517 = vsel %vm82, %v421, 0
  %v520 = vsel %vm82, %v422, 0
  %v523 = vsel %vm82, %v423, 0
  %v526 = vsel %vm82, %v424, 0
  %v529 = vsel %vm82, %v425, 0
  %v532 = vsel %vm82, %v426, 0
  %v535 = vsel %vm82, %v427, 0
  %v538 = vsel %vm82, %v428, 0
  %v541 = vsel %vm82, %v429, 0
  %v544 = vsel %vm82, %v430, 0
  %v547 = vsel %vm82, %v431, 0
  %v550 = vsel %vm82, %v432, 0
  %v553 = vsel %vm82, %v433, 0
  %v556 = vsel %vm82, %v434, 0
  %v559 = vsel %vm82, %v435, 0
  %v562 = vsel %vm82, %v436, 0
  %v565 = vsel %vm82, %v437, 0
  %v568 = vsel %vm82, %v438, 0
  %v571 = vsel %vm82, %v439, 0
  %v574 = vsel %vm82, %v440, 0
  %v577 = vsel %vm82, %v441, 0
  %v580 = vsel %vm82, %v442, 0
  %v583 = vsel %vm82, %v443, 0
  %v586 = vsel %vm82, %v444, 0
  %v589 = vsel %vm82, %v445, 0
  %v592 = vsel %vm82, %v446, 0
  %594 = vmatpush.msra.mxu0 0.0
  %595 = vmatpush.msra.mxu0 0.0
  %596 = vmatpush.msra.mxu0 0.0
  %597 = vmatpush.msra.mxu0 0.0
  %598 = vmatpush.msra.mxu0 0.0
  %599 = vmatpush.msra.mxu0 0.0
  %600 = vmatpush.msra.mxu0 %v232
  %601 = vmatpush.msra.mxu0 %v31
  %602 = vmatpush.msra.mxu0 %v30
  %603 = vmatpush.msra.mxu0 %v29
  %604 = vmatpush.msra.mxu0 %v28
  %605 = vmatpush.msra.mxu0 %v27
  %606 = vmatpush.msra.mxu0 %v26
  %607 = vmatpush.msra.mxu0 %v25
  %608 = vmatpush.msra.mxu0 %v24
  %609 = vmatpush.msra.mxu0 %v23
  %610 = vmatmul.f32.gmra.mxu0 %v448
  %v611 = vpop.f32.mrf.mxu0
  %v612 = vadd.f32 0.0, %v611
  %613 = vmatmul.f32.gmra.mxu0 %v451
  %v614 = vpop.f32.mrf.mxu0
  %v615 = vadd.f32 0.0, %v614
  %616 = vmatmul.f32.gmra.mxu0 %v454
  %v617 = vpop.f32.mrf.mxu0
  %v618 = vadd.f32 0.0, %v617
  %619 = vmatmul.f32.gmra.mxu0 %v457
  %v620 = vpop.f32.mrf.mxu0
  %v621 = vadd.f32 0.0, %v620
  %622 = vmatmul.f32.gmra.mxu0 %v460
  %v623 = vpop.f32.mrf.mxu0
  %v624 = vadd.f32 0.0, %v623
  %625 = vmatmul.f32.gmra.mxu0 %v463
  %v626 = vpop.f32.mrf.mxu0
  %v627 = vadd.f32 0.0, %v626
  %628 = vmatmul.f32.gmra.mxu0 %v466
  %v629 = vpop.f32.mrf.mxu0
  %v630 = vadd.f32 0.0, %v629
  %631 = vmatmul.f32.gmra.mxu0 %v469
  %v632 = vpop.f32.mrf.mxu0
  %v633 = vadd.f32 0.0, %v632
  %634 = vmatmul.f32.gmra.mxu0 %v472
  %v635 = vpop.f32.mrf.mxu0
  %v636 = vadd.f32 0.0, %v635
  %637 = vmatmul.f32.gmra.mxu0 %v475
  %v638 = vpop.f32.mrf.mxu0
  %v639 = vadd.f32 0.0, %v638
  %640 = vmatmul.f32.gmra.mxu0 %v478
  %v641 = vpop.f32.mrf.mxu0
  %v642 = vadd.f32 0.0, %v641
  %643 = vmatmul.f32.gmra.mxu0 %v481
  %v644 = vpop.f32.mrf.mxu0
  %v645 = vadd.f32 0.0, %v644
  %646 = vmatmul.f32.gmra.mxu0 %v484
  %v647 = vpop.f32.mrf.mxu0
  %v648 = vadd.f32 0.0, %v647
  %649 = vmatmul.f32.gmra.mxu0 %v487
  %v650 = vpop.f32.mrf.mxu0
  %v651 = vadd.f32 0.0, %v650
  %652 = vmatmul.f32.gmra.mxu0 %v490
  %v653 = vpop.f32.mrf.mxu0
  %v654 = vadd.f32 0.0, %v653
  %655 = vmatmul.f32.gmra.mxu0 %v493
  %v656 = vpop.f32.mrf.mxu0
  %v657 = vadd.f32 0.0, %v656
  %658 = vmatmul.f32.gmra.mxu0 %v496
  %v659 = vpop.f32.mrf.mxu0
  %v660 = vadd.f32 0.0, %v659
  %661 = vmatmul.f32.gmra.mxu0 %v499
  %v662 = vpop.f32.mrf.mxu0
  %v663 = vadd.f32 0.0, %v662
  %664 = vmatmul.f32.gmra.mxu0 %v502
  %v665 = vpop.f32.mrf.mxu0
  %v666 = vadd.f32 0.0, %v665
  %667 = vmatmul.f32.gmra.mxu0 %v505
  %v668 = vpop.f32.mrf.mxu0
  %v669 = vadd.f32 0.0, %v668
  %670 = vmatmul.f32.gmra.mxu0 %v508
  %v671 = vpop.f32.mrf.mxu0
  %v672 = vadd.f32 0.0, %v671
  %673 = vmatmul.f32.gmra.mxu0 %v511
  %v674 = vpop.f32.mrf.mxu0
  %v675 = vadd.f32 0.0, %v674
  %676 = vmatmul.f32.gmra.mxu0 %v514
  %v677 = vpop.f32.mrf.mxu0
  %v678 = vadd.f32 0.0, %v677
  %679 = vmatmul.f32.gmra.mxu0 %v517
  %v680 = vpop.f32.mrf.mxu0
  %v681 = vadd.f32 0.0, %v680
  %682 = vmatmul.f32.gmra.mxu0 %v520
  %v683 = vpop.f32.mrf.mxu0
  %v684 = vadd.f32 0.0, %v683
  %685 = vmatmul.f32.gmra.mxu0 %v523
  %v686 = vpop.f32.mrf.mxu0
  %v687 = vadd.f32 0.0, %v686
  %688 = vmatmul.f32.gmra.mxu0 %v526
  %v689 = vpop.f32.mrf.mxu0
  %v690 = vadd.f32 0.0, %v689
  %691 = vmatmul.f32.gmra.mxu0 %v529
  %v692 = vpop.f32.mrf.mxu0
  %v693 = vadd.f32 0.0, %v692
  %694 = vmatmul.f32.gmra.mxu0 %v532
  %v695 = vpop.f32.mrf.mxu0
  %v696 = vadd.f32 0.0, %v695
  %697 = vmatmul.f32.gmra.mxu0 %v535
  %v698 = vpop.f32.mrf.mxu0
  %v699 = vadd.f32 0.0, %v698
  %700 = vmatmul.f32.gmra.mxu0 %v538
  %v701 = vpop.f32.mrf.mxu0
  %v702 = vadd.f32 0.0, %v701
  %703 = vmatmul.f32.gmra.mxu0 %v541
  %v704 = vpop.f32.mrf.mxu0
  %v705 = vadd.f32 0.0, %v704
  %706 = vmatmul.f32.gmra.mxu0 %v544
  %v707 = vpop.f32.mrf.mxu0
  %v708 = vadd.f32 0.0, %v707
  %709 = vmatmul.f32.gmra.mxu0 %v547
  %v710 = vpop.f32.mrf.mxu0
  %v711 = vadd.f32 0.0, %v710
  %712 = vmatmul.f32.gmra.mxu0 %v550
  %v713 = vpop.f32.mrf.mxu0
  %v714 = vadd.f32 0.0, %v713
  %715 = vmatmul.f32.gmra.mxu0 %v553
  %v716 = vpop.f32.mrf.mxu0
  %v717 = vadd.f32 0.0, %v716
  %718 = vmatmul.f32.gmra.mxu0 %v556
  %v719 = vpop.f32.mrf.mxu0
  %v720 = vadd.f32 0.0, %v719
  %721 = vmatmul.f32.gmra.mxu0 %v559
  %v722 = vpop.f32.mrf.mxu0
  %v723 = vadd.f32 0.0, %v722
  %724 = vmatmul.f32.gmra.mxu0 %v562
  %v725 = vpop.f32.mrf.mxu0
  %v726 = vadd.f32 0.0, %v725
  %727 = vmatmul.f32.gmra.mxu0 %v565
  %v728 = vpop.f32.mrf.mxu0
  %v729 = vadd.f32 0.0, %v728
  %730 = vmatmul.f32.gmra.mxu0 %v568
  %v731 = vpop.f32.mrf.mxu0
  %v732 = vadd.f32 0.0, %v731
  %733 = vmatmul.f32.gmra.mxu0 %v571
  %v734 = vpop.f32.mrf.mxu0
  %v735 = vadd.f32 0.0, %v734
  %736 = vmatmul.f32.gmra.mxu0 %v574
  %v737 = vpop.f32.mrf.mxu0
  %v738 = vadd.f32 0.0, %v737
  %739 = vmatmul.f32.gmra.mxu0 %v577
  %v740 = vpop.f32.mrf.mxu0
  %v741 = vadd.f32 0.0, %v740
  %742 = vmatmul.f32.gmra.mxu0 %v580
  %v743 = vpop.f32.mrf.mxu0
  %v744 = vadd.f32 0.0, %v743
  %745 = vmatmul.f32.gmra.mxu0 %v583
  %v746 = vpop.f32.mrf.mxu0
  %v747 = vadd.f32 0.0, %v746
  %748 = vmatmul.f32.gmra.mxu0 %v586
  %v749 = vpop.f32.mrf.mxu0
  %v750 = vadd.f32 0.0, %v749
  %751 = vmatmul.f32.gmra.mxu0 %v589
  %v752 = vpop.f32.mrf.mxu0
  %v753 = vadd.f32 0.0, %v752
  %754 = vmatmul.f32.gmra.mxu0 %v592
  %v755 = vpop.f32.mrf.mxu0
  %v756 = vadd.f32 0.0, %v755
  %757 = vdwg.mxu0
  %v758 = vmax.f32 %v252, %v612
  %v759 = vmax.f32 %v255, %v615
  %v760 = vmax.f32 %v258, %v618
  %v761 = vmax.f32 %v261, %v621
  %v762 = vmax.f32 %v264, %v624
  %v763 = vmax.f32 %v267, %v627
  %v764 = vmax.f32 %v270, %v630
  %v765 = vmax.f32 %v273, %v633
  %v766 = vmax.f32 %v276, %v636
  %v767 = vmax.f32 %v279, %v639
  %v768 = vmax.f32 %v282, %v642
  %v769 = vmax.f32 %v285, %v645
  %v770 = vmax.f32 %v288, %v648
  %v771 = vmax.f32 %v291, %v651
  %v772 = vmax.f32 %v294, %v654
  %v773 = vmax.f32 %v297, %v657
  %v774 = vmax.f32 %v300, %v660
  %v775 = vmax.f32 %v303, %v663
  %v776 = vmax.f32 %v306, %v666
  %v777 = vmax.f32 %v309, %v669
  %v778 = vmax.f32 %v312, %v672
  %v779 = vmax.f32 %v315, %v675
  %v780 = vmax.f32 %v318, %v678
  %v781 = vmax.f32 %v321, %v681
  %v782 = vmax.f32 %v324, %v684
  %v783 = vmax.f32 %v327, %v687
  %v784 = vmax.f32 %v330, %v690
  %v785 = vmax.f32 %v333, %v693
  %v786 = vmax.f32 %v336, %v696
  %v787 = vmax.f32 %v339, %v699
  %v788 = vmax.f32 %v342, %v702
  %v789 = vmax.f32 %v345, %v705
  %v790 = vmax.f32 %v348, %v708
  %v791 = vmax.f32 %v351, %v711
  %v792 = vmax.f32 %v354, %v714
  %v793 = vmax.f32 %v357, %v717
  %v794 = vmax.f32 %v360, %v720
  %v795 = vmax.f32 %v363, %v723
  %v796 = vmax.f32 %v366, %v726
  %v797 = vmax.f32 %v369, %v729
  %v798 = vmax.f32 %v372, %v732
  %v799 = vmax.f32 %v375, %v735
  %v800 = vmax.f32 %v378, %v738
  %v801 = vmax.f32 %v381, %v741
  %v802 = vmax.f32 %v384, %v744
  %v803 = vmax.f32 %v387, %v747
  %v804 = vmax.f32 %v390, %v750
  %v805 = vmax.f32 %v393, %v753
  %v806 = vmax.f32 %v396, %v756
  %v807 = vld [vmem:[%s2] sm:$0xff]
  %v808 = vld [vmem:[%s2 + $0x8] sm:$0xff]
  %v809 = vld [vmem:[%s2 + $0x10] sm:$0xff]
  %v810 = vld [vmem:[%s2 + $0x18] sm:$0xff]
  %v811 = vld [vmem:[%s2 + $0x20] sm:$0xff]
  %v812 = vld [vmem:[%s2 + $0x28] sm:$0xff]
  %v813 = vld [vmem:[%s2 + $0x30] sm:$0xff]
  %v814 = vld [vmem:[%s2 + $0x38] sm:$0xff]
  %v815 = vld [vmem:[%s2 + $0x40] sm:$0xff]
  %v816 = vld [vmem:[%s2 + $0x48] sm:$0xff]
  %v817 = vld [vmem:[%s2 + $0x50] sm:$0xff]
  %v818 = vld [vmem:[%s2 + $0x58] sm:$0xff]
  %v819 = vld [vmem:[%s2 + $0x60] sm:$0xff]
  %v820 = vld [vmem:[%s2 + $0x68] sm:$0xff]
  %v821 = vld [vmem:[%s2 + $0x70] sm:$0xff]
  %v822 = vld [vmem:[%s2 + $0x78] sm:$0xff]
  %v823 = vld [vmem:[%s2 + $0x80] sm:$0xff]
  %v824 = vld [vmem:[%s2 + $0x88] sm:$0xff]
  %v825 = vld [vmem:[%s2 + $0x90] sm:$0xff]
  %v826 = vld [vmem:[%s2 + $0x98] sm:$0xff]
  %v827 = vld [vmem:[%s2 + $0xa0] sm:$0xff]
  %v828 = vld [vmem:[%s2 + $0xa8] sm:$0xff]
  %v829 = vld [vmem:[%s2 + $0xb0] sm:$0xff]
  %v830 = vld [vmem:[%s2 + $0xb8] sm:$0xff]
  %v831 = vld [vmem:[%s2 + $0xc0] sm:$0xff]
  %v832 = vld [vmem:[%s2 + $0xc8] sm:$0xff]
  %v833 = vld [vmem:[%s2 + $0xd0] sm:$0xff]
  %v834 = vld [vmem:[%s2 + $0xd8] sm:$0xff]
  %v835 = vld [vmem:[%s2 + $0xe0] sm:$0xff]
  %v836 = vld [vmem:[%s2 + $0xe8] sm:$0xff]
  %v837 = vld [vmem:[%s2 + $0xf0] sm:$0xff]
  %v838 = vld [vmem:[%s2 + $0xf8] sm:$0xff]
  %v839 = vld [vmem:[%s2 + $0x100] sm:$0xff]
  %v840 = vld [vmem:[%s2 + $0x108] sm:$0xff]
  %v841 = vld [vmem:[%s2 + $0x110] sm:$0xff]
  %v842 = vld [vmem:[%s2 + $0x118] sm:$0xff]
  %v843 = vld [vmem:[%s2 + $0x120] sm:$0xff]
  %v844 = vld [vmem:[%s2 + $0x128] sm:$0xff]
  %v845 = vld [vmem:[%s2 + $0x130] sm:$0xff]
  %v846 = vld [vmem:[%s2 + $0x138] sm:$0xff]
  %v847 = vld [vmem:[%s2 + $0x140] sm:$0xff]
  %v848 = vld [vmem:[%s2 + $0x148] sm:$0xff]
  %v849 = vld [vmem:[%s2 + $0x150] sm:$0xff]
  %v850 = vld [vmem:[%s2 + $0x158] sm:$0xff]
  %v851 = vld [vmem:[%s2 + $0x160] sm:$0xff]
  %v852 = vld [vmem:[%s2 + $0x168] sm:$0xff]
  %v853 = vld [vmem:[%s2 + $0x170] sm:$0xff]
  %v854 = vld [vmem:[%s2 + $0x178] sm:$0xff]
  %v855 = vld [vmem:[%s2 + $0x180] sm:$0xff]
  %v857 = vsel %vm82, %v807, 0
  %v860 = vsel %vm82, %v808, 0
  %v863 = vsel %vm82, %v809, 0
  %v866 = vsel %vm82, %v810, 0
  %v869 = vsel %vm82, %v811, 0
  %v872 = vsel %vm82, %v812, 0
  %v875 = vsel %vm82, %v813, 0
  %v878 = vsel %vm82, %v814, 0
  %v881 = vsel %vm82, %v815, 0
  %v884 = vsel %vm82, %v816, 0
  %v887 = vsel %vm82, %v817, 0
  %v890 = vsel %vm82, %v818, 0
  %v893 = vsel %vm82, %v819, 0
  %v896 = vsel %vm82, %v820, 0
  %v899 = vsel %vm82, %v821, 0
  %v902 = vsel %vm82, %v822, 0
  %v905 = vsel %vm82, %v823, 0
  %v908 = vsel %vm82, %v824, 0
  %v911 = vsel %vm82, %v825, 0
  %v914 = vsel %vm82, %v826, 0
  %v917 = vsel %vm82, %v827, 0
  %v920 = vsel %vm82, %v828, 0
  %v923 = vsel %vm82, %v829, 0
  %v926 = vsel %vm82, %v830, 0
  %v929 = vsel %vm82, %v831, 0
  %v932 = vsel %vm82, %v832, 0
  %v935 = vsel %vm82, %v833, 0
  %v938 = vsel %vm82, %v834, 0
  %v941 = vsel %vm82, %v835, 0
  %v944 = vsel %vm82, %v836, 0
  %v947 = vsel %vm82, %v837, 0
  %v950 = vsel %vm82, %v838, 0
  %v953 = vsel %vm82, %v839, 0
  %v956 = vsel %vm82, %v840, 0
  %v959 = vsel %vm82, %v841, 0
  %v962 = vsel %vm82, %v842, 0
  %v965 = vsel %vm82, %v843, 0
  %v968 = vsel %vm82, %v844, 0
  %v971 = vsel %vm82, %v845, 0
  %v974 = vsel %vm82, %v846, 0
  %v977 = vsel %vm82, %v847, 0
  %v980 = vsel %vm82, %v848, 0
  %v983 = vsel %vm82, %v849, 0
  %v986 = vsel %vm82, %v850, 0
  %v989 = vsel %vm82, %v851, 0
  %v992 = vsel %vm82, %v852, 0
  %v995 = vsel %vm82, %v853, 0
  %v998 = vsel %vm82, %v854, 0
  %v1001 = vsel %vm82, %v855, 0
  %1003 = vmatpush.msra.mxu0 0.0
  %1004 = vmatpush.msra.mxu0 0.0
  %1005 = vmatpush.msra.mxu0 0.0
  %1006 = vmatpush.msra.mxu0 0.0
  %1007 = vmatpush.msra.mxu0 0.0
  %1008 = vmatpush.msra.mxu0 0.0
  %1009 = vmatpush.msra.mxu0 %v232
  %1010 = vmatpush.msra.mxu0 %v31
  %1011 = vmatpush.msra.mxu0 %v30
  %1012 = vmatpush.msra.mxu0 %v29
  %1013 = vmatpush.msra.mxu0 %v28
  %1014 = vmatpush.msra.mxu0 %v27
  %1015 = vmatpush.msra.mxu0 %v26
  %1016 = vmatpush.msra.mxu0 %v25
  %1017 = vmatpush.msra.mxu0 %v24
  %1018 = vmatpush.msra.mxu0 %v23
  %1019 = vmatmul.f32.gmra.mxu0 %v857
  %v1020 = vpop.f32.mrf.mxu0
  %v1021 = vadd.f32 0.0, %v1020
  %1022 = vmatmul.f32.gmra.mxu0 %v860
  %v1023 = vpop.f32.mrf.mxu0
  %v1024 = vadd.f32 0.0, %v1023
  %1025 = vmatmul.f32.gmra.mxu0 %v863
  %v1026 = vpop.f32.mrf.mxu0
  %v1027 = vadd.f32 0.0, %v1026
  %1028 = vmatmul.f32.gmra.mxu0 %v866
  %v1029 = vpop.f32.mrf.mxu0
  %v1030 = vadd.f32 0.0, %v1029
  %1031 = vmatmul.f32.gmra.mxu0 %v869
  %v1032 = vpop.f32.mrf.mxu0
  %v1033 = vadd.f32 0.0, %v1032
  %1034 = vmatmul.f32.gmra.mxu0 %v872
  %v1035 = vpop.f32.mrf.mxu0
  %v1036 = vadd.f32 0.0, %v1035
  %1037 = vmatmul.f32.gmra.mxu0 %v875
  %v1038 = vpop.f32.mrf.mxu0
  %v1039 = vadd.f32 0.0, %v1038
  %1040 = vmatmul.f32.gmra.mxu0 %v878
  %v1041 = vpop.f32.mrf.mxu0
  %v1042 = vadd.f32 0.0, %v1041
  %1043 = vmatmul.f32.gmra.mxu0 %v881
  %v1044 = vpop.f32.mrf.mxu0
  %v1045 = vadd.f32 0.0, %v1044
  %1046 = vmatmul.f32.gmra.mxu0 %v884
  %v1047 = vpop.f32.mrf.mxu0
  %v1048 = vadd.f32 0.0, %v1047
  %1049 = vmatmul.f32.gmra.mxu0 %v887
  %v1050 = vpop.f32.mrf.mxu0
  %v1051 = vadd.f32 0.0, %v1050
  %1052 = vmatmul.f32.gmra.mxu0 %v890
  %v1053 = vpop.f32.mrf.mxu0
  %v1054 = vadd.f32 0.0, %v1053
  %1055 = vmatmul.f32.gmra.mxu0 %v893
  %v1056 = vpop.f32.mrf.mxu0
  %v1057 = vadd.f32 0.0, %v1056
  %1058 = vmatmul.f32.gmra.mxu0 %v896
  %v1059 = vpop.f32.mrf.mxu0
  %v1060 = vadd.f32 0.0, %v1059
  %1061 = vmatmul.f32.gmra.mxu0 %v899
  %v1062 = vpop.f32.mrf.mxu0
  %v1063 = vadd.f32 0.0, %v1062
  %1064 = vmatmul.f32.gmra.mxu0 %v902
  %v1065 = vpop.f32.mrf.mxu0
  %v1066 = vadd.f32 0.0, %v1065
  %1067 = vmatmul.f32.gmra.mxu0 %v905
  %v1068 = vpop.f32.mrf.mxu0
  %v1069 = vadd.f32 0.0, %v1068
  %1070 = vmatmul.f32.gmra.mxu0 %v908
  %v1071 = vpop.f32.mrf.mxu0
  %v1072 = vadd.f32 0.0, %v1071
  %1073 = vmatmul.f32.gmra.mxu0 %v911
  %v1074 = vpop.f32.mrf.mxu0
  %v1075 = vadd.f32 0.0, %v1074
  %1076 = vmatmul.f32.gmra.mxu0 %v914
  %v1077 = vpop.f32.mrf.mxu0
  %v1078 = vadd.f32 0.0, %v1077
  %1079 = vmatmul.f32.gmra.mxu0 %v917
  %v1080 = vpop.f32.mrf.mxu0
  %v1081 = vadd.f32 0.0, %v1080
  %1082 = vmatmul.f32.gmra.mxu0 %v920
  %v1083 = vpop.f32.mrf.mxu0
  %v1084 = vadd.f32 0.0, %v1083
  %1085 = vmatmul.f32.gmra.mxu0 %v923
  %v1086 = vpop.f32.mrf.mxu0
  %v1087 = vadd.f32 0.0, %v1086
  %1088 = vmatmul.f32.gmra.mxu0 %v926
  %v1089 = vpop.f32.mrf.mxu0
  %v1090 = vadd.f32 0.0, %v1089
  %1091 = vmatmul.f32.gmra.mxu0 %v929
  %v1092 = vpop.f32.mrf.mxu0
  %v1093 = vadd.f32 0.0, %v1092
  %1094 = vmatmul.f32.gmra.mxu0 %v932
  %v1095 = vpop.f32.mrf.mxu0
  %v1096 = vadd.f32 0.0, %v1095
  %1097 = vmatmul.f32.gmra.mxu0 %v935
  %v1098 = vpop.f32.mrf.mxu0
  %v1099 = vadd.f32 0.0, %v1098
  %1100 = vmatmul.f32.gmra.mxu0 %v938
  %v1101 = vpop.f32.mrf.mxu0
  %v1102 = vadd.f32 0.0, %v1101
  %1103 = vmatmul.f32.gmra.mxu0 %v941
  %v1104 = vpop.f32.mrf.mxu0
  %v1105 = vadd.f32 0.0, %v1104
  %1106 = vmatmul.f32.gmra.mxu0 %v944
  %v1107 = vpop.f32.mrf.mxu0
  %v1108 = vadd.f32 0.0, %v1107
  %1109 = vmatmul.f32.gmra.mxu0 %v947
  %v1110 = vpop.f32.mrf.mxu0
  %v1111 = vadd.f32 0.0, %v1110
  %1112 = vmatmul.f32.gmra.mxu0 %v950
  %v1113 = vpop.f32.mrf.mxu0
  %v1114 = vadd.f32 0.0, %v1113
  %1115 = vmatmul.f32.gmra.mxu0 %v953
  %v1116 = vpop.f32.mrf.mxu0
  %v1117 = vadd.f32 0.0, %v1116
  %1118 = vmatmul.f32.gmra.mxu0 %v956
  %v1119 = vpop.f32.mrf.mxu0
  %v1120 = vadd.f32 0.0, %v1119
  %1121 = vmatmul.f32.gmra.mxu0 %v959
  %v1122 = vpop.f32.mrf.mxu0
  %v1123 = vadd.f32 0.0, %v1122
  %1124 = vmatmul.f32.gmra.mxu0 %v962
  %v1125 = vpop.f32.mrf.mxu0
  %v1126 = vadd.f32 0.0, %v1125
  %1127 = vmatmul.f32.gmra.mxu0 %v965
  %v1128 = vpop.f32.mrf.mxu0
  %v1129 = vadd.f32 0.0, %v1128
  %1130 = vmatmul.f32.gmra.mxu0 %v968
  %v1131 = vpop.f32.mrf.mxu0
  %v1132 = vadd.f32 0.0, %v1131
  %1133 = vmatmul.f32.gmra.mxu0 %v971
  %v1134 = vpop.f32.mrf.mxu0
  %v1135 = vadd.f32 0.0, %v1134
  %1136 = vmatmul.f32.gmra.mxu0 %v974
  %v1137 = vpop.f32.mrf.mxu0
  %v1138 = vadd.f32 0.0, %v1137
  %1139 = vmatmul.f32.gmra.mxu0 %v977
  %v1140 = vpop.f32.mrf.mxu0
  %v1141 = vadd.f32 0.0, %v1140
  %1142 = vmatmul.f32.gmra.mxu0 %v980
  %v1143 = vpop.f32.mrf.mxu0
  %v1144 = vadd.f32 0.0, %v1143
  %1145 = vmatmul.f32.gmra.mxu0 %v983
  %v1146 = vpop.f32.mrf.mxu0
  %v1147 = vadd.f32 0.0, %v1146
  %1148 = vmatmul.f32.gmra.mxu0 %v986
  %v1149 = vpop.f32.mrf.mxu0
  %v1150 = vadd.f32 0.0, %v1149
  %1151 = vmatmul.f32.gmra.mxu0 %v989
  %v1152 = vpop.f32.mrf.mxu0
  %v1153 = vadd.f32 0.0, %v1152
  %1154 = vmatmul.f32.gmra.mxu0 %v992
  %v1155 = vpop.f32.mrf.mxu0
  %v1156 = vadd.f32 0.0, %v1155
  %1157 = vmatmul.f32.gmra.mxu0 %v995
  %v1158 = vpop.f32.mrf.mxu0
  %v1159 = vadd.f32 0.0, %v1158
  %1160 = vmatmul.f32.gmra.mxu0 %v998
  %v1161 = vpop.f32.mrf.mxu0
  %v1162 = vadd.f32 0.0, %v1161
  %1163 = vmatmul.f32.gmra.mxu0 %v1001
  %v1164 = vpop.f32.mrf.mxu0
  %v1165 = vadd.f32 0.0, %v1164
  %1166 = vdwg.mxu0
  %v1167 = vld [vmem:[%s3] sm:$0xff]
  %v1168 = vld [vmem:[%s3 + $0x8] sm:$0xff]
  %v1169 = vld [vmem:[%s3 + $0x10] sm:$0xff]
  %v1170 = vld [vmem:[%s3 + $0x18] sm:$0xff]
  %v1171 = vld [vmem:[%s3 + $0x20] sm:$0xff]
  %v1172 = vld [vmem:[%s3 + $0x28] sm:$0xff]
  %v1173 = vld [vmem:[%s3 + $0x30] sm:$0xff]
  %v1174 = vld [vmem:[%s3 + $0x38] sm:$0xff]
  %v1175 = vld [vmem:[%s3 + $0x40] sm:$0xff]
  %v1176 = vld [vmem:[%s3 + $0x48] sm:$0xff]
  %v1177 = vld [vmem:[%s3 + $0x50] sm:$0xff]
  %v1178 = vld [vmem:[%s3 + $0x58] sm:$0xff]
  %v1179 = vld [vmem:[%s3 + $0x60] sm:$0xff]
  %v1180 = vld [vmem:[%s3 + $0x68] sm:$0xff]
  %v1181 = vld [vmem:[%s3 + $0x70] sm:$0xff]
  %v1182 = vld [vmem:[%s3 + $0x78] sm:$0xff]
  %v1183 = vld [vmem:[%s3 + $0x80] sm:$0xff]
  %v1184 = vld [vmem:[%s3 + $0x88] sm:$0xff]
  %v1185 = vld [vmem:[%s3 + $0x90] sm:$0xff]
  %v1186 = vld [vmem:[%s3 + $0x98] sm:$0xff]
  %v1187 = vld [vmem:[%s3 + $0xa0] sm:$0xff]
  %v1188 = vld [vmem:[%s3 + $0xa8] sm:$0xff]
  %v1189 = vld [vmem:[%s3 + $0xb0] sm:$0xff]
  %v1190 = vld [vmem:[%s3 + $0xb8] sm:$0xff]
  %v1191 = vld [vmem:[%s3 + $0xc0] sm:$0xff]
  %v1192 = vld [vmem:[%s3 + $0xc8] sm:$0xff]
  %v1193 = vld [vmem:[%s3 + $0xd0] sm:$0xff]
  %v1194 = vld [vmem:[%s3 + $0xd8] sm:$0xff]
  %v1195 = vld [vmem:[%s3 + $0xe0] sm:$0xff]
  %v1196 = vld [vmem:[%s3 + $0xe8] sm:$0xff]
  %v1197 = vld [vmem:[%s3 + $0xf0] sm:$0xff]
  %v1198 = vld [vmem:[%s3 + $0xf8] sm:$0xff]
  %v1199 = vld [vmem:[%s3 + $0x100] sm:$0xff]
  %v1200 = vld [vmem:[%s3 + $0x108] sm:$0xff]
  %v1201 = vld [vmem:[%s3 + $0x110] sm:$0xff]
  %v1202 = vld [vmem:[%s3 + $0x118] sm:$0xff]
  %v1203 = vld [vmem:[%s3 + $0x120] sm:$0xff]
  %v1204 = vld [vmem:[%s3 + $0x128] sm:$0xff]
  %v1205 = vld [vmem:[%s3 + $0x130] sm:$0xff]
  %v1206 = vld [vmem:[%s3 + $0x138] sm:$0xff]
  %v1207 = vld [vmem:[%s3 + $0x140] sm:$0xff]
  %v1208 = vld [vmem:[%s3 + $0x148] sm:$0xff]
  %v1209 = vld [vmem:[%s3 + $0x150] sm:$0xff]
  %v1210 = vld [vmem:[%s3 + $0x158] sm:$0xff]
  %v1211 = vld [vmem:[%s3 + $0x160] sm:$0xff]
  %v1212 = vld [vmem:[%s3 + $0x168] sm:$0xff]
  %v1213 = vld [vmem:[%s3 + $0x170] sm:$0xff]
  %v1214 = vld [vmem:[%s3 + $0x178] sm:$0xff]
  %v1215 = vld [vmem:[%s3 + $0x180] sm:$0xff]
  %v1217 = vsel %vm82, %v1167, 0
  %v1220 = vsel %vm82, %v1168, 0
  %v1223 = vsel %vm82, %v1169, 0
  %v1226 = vsel %vm82, %v1170, 0
  %v1229 = vsel %vm82, %v1171, 0
  %v1232 = vsel %vm82, %v1172, 0
  %v1235 = vsel %vm82, %v1173, 0
  %v1238 = vsel %vm82, %v1174, 0
  %v1241 = vsel %vm82, %v1175, 0
  %v1244 = vsel %vm82, %v1176, 0
  %v1247 = vsel %vm82, %v1177, 0
  %v1250 = vsel %vm82, %v1178, 0
  %v1253 = vsel %vm82, %v1179, 0
  %v1256 = vsel %vm82, %v1180, 0
  %v1259 = vsel %vm82, %v1181, 0
  %v1262 = vsel %vm82, %v1182, 0
  %v1265 = vsel %vm82, %v1183, 0
  %v1268 = vsel %vm82, %v1184, 0
  %v1271 = vsel %vm82, %v1185, 0
  %v1274 = vsel %vm82, %v1186, 0
  %v1277 = vsel %vm82, %v1187, 0
  %v1280 = vsel %vm82, %v1188, 0
  %v1283 = vsel %vm82, %v1189, 0
  %v1286 = vsel %vm82, %v1190, 0
  %v1289 = vsel %vm82, %v1191, 0
  %v1292 = vsel %vm82, %v1192, 0
  %v1295 = vsel %vm82, %v1193, 0
  %v1298 = vsel %vm82, %v1194, 0
  %v1301 = vsel %vm82, %v1195, 0
  %v1304 = vsel %vm82, %v1196, 0
  %v1307 = vsel %vm82, %v1197, 0
  %v1310 = vsel %vm82, %v1198, 0
  %v1313 = vsel %vm82, %v1199, 0
  %v1316 = vsel %vm82, %v1200, 0
  %v1319 = vsel %vm82, %v1201, 0
  %v1322 = vsel %vm82, %v1202, 0
  %v1325 = vsel %vm82, %v1203, 0
  %v1328 = vsel %vm82, %v1204, 0
  %v1331 = vsel %vm82, %v1205, 0
  %v1334 = vsel %vm82, %v1206, 0
  %v1337 = vsel %vm82, %v1207, 0
  %v1340 = vsel %vm82, %v1208, 0
  %v1343 = vsel %vm82, %v1209, 0
  %v1346 = vsel %vm82, %v1210, 0
  %v1349 = vsel %vm82, %v1211, 0
  %v1352 = vsel %vm82, %v1212, 0
  %v1355 = vsel %vm82, %v1213, 0
  %v1358 = vsel %vm82, %v1214, 0
  %v1361 = vsel %vm82, %v1215, 0
  %1363 = vmatpush.msra.mxu0 0.0
  %1364 = vmatpush.msra.mxu0 0.0
  %1365 = vmatpush.msra.mxu0 0.0
  %1366 = vmatpush.msra.mxu0 0.0
  %1367 = vmatpush.msra.mxu0 0.0
  %1368 = vmatpush.msra.mxu0 0.0
  %1369 = vmatpush.msra.mxu0 %v232
  %1370 = vmatpush.msra.mxu0 %v31
  %1371 = vmatpush.msra.mxu0 %v30
  %1372 = vmatpush.msra.mxu0 %v29
  %1373 = vmatpush.msra.mxu0 %v28
  %1374 = vmatpush.msra.mxu0 %v27
  %1375 = vmatpush.msra.mxu0 %v26
  %1376 = vmatpush.msra.mxu0 %v25
  %1377 = vmatpush.msra.mxu0 %v24
  %1378 = vmatpush.msra.mxu0 %v23
  %1379 = vmatmul.f32.gmra.mxu0 %v1217
  %v1380 = vpop.f32.mrf.mxu0
  %v1381 = vadd.f32 0.0, %v1380
  %1382 = vmatmul.f32.gmra.mxu0 %v1220
  %v1383 = vpop.f32.mrf.mxu0
  %v1384 = vadd.f32 0.0, %v1383
  %1385 = vmatmul.f32.gmra.mxu0 %v1223
  %v1386 = vpop.f32.mrf.mxu0
  %v1387 = vadd.f32 0.0, %v1386
  %1388 = vmatmul.f32.gmra.mxu0 %v1226
  %v1389 = vpop.f32.mrf.mxu0
  %v1390 = vadd.f32 0.0, %v1389
  %1391 = vmatmul.f32.gmra.mxu0 %v1229
  %v1392 = vpop.f32.mrf.mxu0
  %v1393 = vadd.f32 0.0, %v1392
  %1394 = vmatmul.f32.gmra.mxu0 %v1232
  %v1395 = vpop.f32.mrf.mxu0
  %v1396 = vadd.f32 0.0, %v1395
  %1397 = vmatmul.f32.gmra.mxu0 %v1235
  %v1398 = vpop.f32.mrf.mxu0
  %v1399 = vadd.f32 0.0, %v1398
  %1400 = vmatmul.f32.gmra.mxu0 %v1238
  %v1401 = vpop.f32.mrf.mxu0
  %v1402 = vadd.f32 0.0, %v1401
  %1403 = vmatmul.f32.gmra.mxu0 %v1241
  %v1404 = vpop.f32.mrf.mxu0
  %v1405 = vadd.f32 0.0, %v1404
  %1406 = vmatmul.f32.gmra.mxu0 %v1244
  %v1407 = vpop.f32.mrf.mxu0
  %v1408 = vadd.f32 0.0, %v1407
  %1409 = vmatmul.f32.gmra.mxu0 %v1247
  %v1410 = vpop.f32.mrf.mxu0
  %v1411 = vadd.f32 0.0, %v1410
  %1412 = vmatmul.f32.gmra.mxu0 %v1250
  %v1413 = vpop.f32.mrf.mxu0
  %v1414 = vadd.f32 0.0, %v1413
  %1415 = vmatmul.f32.gmra.mxu0 %v1253
  %v1416 = vpop.f32.mrf.mxu0
  %v1417 = vadd.f32 0.0, %v1416
  %1418 = vmatmul.f32.gmra.mxu0 %v1256
  %v1419 = vpop.f32.mrf.mxu0
  %v1420 = vadd.f32 0.0, %v1419
  %1421 = vmatmul.f32.gmra.mxu0 %v1259
  %v1422 = vpop.f32.mrf.mxu0
  %v1423 = vadd.f32 0.0, %v1422
  %1424 = vmatmul.f32.gmra.mxu0 %v1262
  %v1425 = vpop.f32.mrf.mxu0
  %v1426 = vadd.f32 0.0, %v1425
  %1427 = vmatmul.f32.gmra.mxu0 %v1265
  %v1428 = vpop.f32.mrf.mxu0
  %v1429 = vadd.f32 0.0, %v1428
  %1430 = vmatmul.f32.gmra.mxu0 %v1268
  %v1431 = vpop.f32.mrf.mxu0
  %v1432 = vadd.f32 0.0, %v1431
  %1433 = vmatmul.f32.gmra.mxu0 %v1271
  %v1434 = vpop.f32.mrf.mxu0
  %v1435 = vadd.f32 0.0, %v1434
  %1436 = vmatmul.f32.gmra.mxu0 %v1274
  %v1437 = vpop.f32.mrf.mxu0
  %v1438 = vadd.f32 0.0, %v1437
  %1439 = vmatmul.f32.gmra.mxu0 %v1277
  %v1440 = vpop.f32.mrf.mxu0
  %v1441 = vadd.f32 0.0, %v1440
  %1442 = vmatmul.f32.gmra.mxu0 %v1280
  %v1443 = vpop.f32.mrf.mxu0
  %v1444 = vadd.f32 0.0, %v1443
  %1445 = vmatmul.f32.gmra.mxu0 %v1283
  %v1446 = vpop.f32.mrf.mxu0
  %v1447 = vadd.f32 0.0, %v1446
  %1448 = vmatmul.f32.gmra.mxu0 %v1286
  %v1449 = vpop.f32.mrf.mxu0
  %v1450 = vadd.f32 0.0, %v1449
  %1451 = vmatmul.f32.gmra.mxu0 %v1289
  %v1452 = vpop.f32.mrf.mxu0
  %v1453 = vadd.f32 0.0, %v1452
  %1454 = vmatmul.f32.gmra.mxu0 %v1292
  %v1455 = vpop.f32.mrf.mxu0
  %v1456 = vadd.f32 0.0, %v1455
  %1457 = vmatmul.f32.gmra.mxu0 %v1295
  %v1458 = vpop.f32.mrf.mxu0
  %v1459 = vadd.f32 0.0, %v1458
  %1460 = vmatmul.f32.gmra.mxu0 %v1298
  %v1461 = vpop.f32.mrf.mxu0
  %v1462 = vadd.f32 0.0, %v1461
  %1463 = vmatmul.f32.gmra.mxu0 %v1301
  %v1464 = vpop.f32.mrf.mxu0
  %v1465 = vadd.f32 0.0, %v1464
  %1466 = vmatmul.f32.gmra.mxu0 %v1304
  %v1467 = vpop.f32.mrf.mxu0
  %v1468 = vadd.f32 0.0, %v1467
  %1469 = vmatmul.f32.gmra.mxu0 %v1307
  %v1470 = vpop.f32.mrf.mxu0
  %v1471 = vadd.f32 0.0, %v1470
  %1472 = vmatmul.f32.gmra.mxu0 %v1310
  %v1473 = vpop.f32.mrf.mxu0
  %v1474 = vadd.f32 0.0, %v1473
  %1475 = vmatmul.f32.gmra.mxu0 %v1313
  %v1476 = vpop.f32.mrf.mxu0
  %v1477 = vadd.f32 0.0, %v1476
  %1478 = vmatmul.f32.gmra.mxu0 %v1316
  %v1479 = vpop.f32.mrf.mxu0
  %v1480 = vadd.f32 0.0, %v1479
  %1481 = vmatmul.f32.gmra.mxu0 %v1319
  %v1482 = vpop.f32.mrf.mxu0
  %v1483 = vadd.f32 0.0, %v1482
  %1484 = vmatmul.f32.gmra.mxu0 %v1322
  %v1485 = vpop.f32.mrf.mxu0
  %v1486 = vadd.f32 0.0, %v1485
  %1487 = vmatmul.f32.gmra.mxu0 %v1325
  %v1488 = vpop.f32.mrf.mxu0
  %v1489 = vadd.f32 0.0, %v1488
  %1490 = vmatmul.f32.gmra.mxu0 %v1328
  %v1491 = vpop.f32.mrf.mxu0
  %v1492 = vadd.f32 0.0, %v1491
  %1493 = vmatmul.f32.gmra.mxu0 %v1331
  %v1494 = vpop.f32.mrf.mxu0
  %v1495 = vadd.f32 0.0, %v1494
  %1496 = vmatmul.f32.gmra.mxu0 %v1334
  %v1497 = vpop.f32.mrf.mxu0
  %v1498 = vadd.f32 0.0, %v1497
  %1499 = vmatmul.f32.gmra.mxu0 %v1337
  %v1500 = vpop.f32.mrf.mxu0
  %v1501 = vadd.f32 0.0, %v1500
  %1502 = vmatmul.f32.gmra.mxu0 %v1340
  %v1503 = vpop.f32.mrf.mxu0
  %v1504 = vadd.f32 0.0, %v1503
  %1505 = vmatmul.f32.gmra.mxu0 %v1343
  %v1506 = vpop.f32.mrf.mxu0
  %v1507 = vadd.f32 0.0, %v1506
  %1508 = vmatmul.f32.gmra.mxu0 %v1346
  %v1509 = vpop.f32.mrf.mxu0
  %v1510 = vadd.f32 0.0, %v1509
  %1511 = vmatmul.f32.gmra.mxu0 %v1349
  %v1512 = vpop.f32.mrf.mxu0
  %v1513 = vadd.f32 0.0, %v1512
  %1514 = vmatmul.f32.gmra.mxu0 %v1352
  %v1515 = vpop.f32.mrf.mxu0
  %v1516 = vadd.f32 0.0, %v1515
  %1517 = vmatmul.f32.gmra.mxu0 %v1355
  %v1518 = vpop.f32.mrf.mxu0
  %v1519 = vadd.f32 0.0, %v1518
  %1520 = vmatmul.f32.gmra.mxu0 %v1358
  %v1521 = vpop.f32.mrf.mxu0
  %v1522 = vadd.f32 0.0, %v1521
  %1523 = vmatmul.f32.gmra.mxu0 %v1361
  %v1524 = vpop.f32.mrf.mxu0
  %v1525 = vadd.f32 0.0, %v1524
  %1526 = vdwg.mxu0
  %v1527 = vmax.f32 %v1021, %v1381
  %v1528 = vmax.f32 %v1024, %v1384
  %v1529 = vmax.f32 %v1027, %v1387
  %v1530 = vmax.f32 %v1030, %v1390
  %v1531 = vmax.f32 %v1033, %v1393
  %v1532 = vmax.f32 %v1036, %v1396
  %v1533 = vmax.f32 %v1039, %v1399
  %v1534 = vmax.f32 %v1042, %v1402
  %v1535 = vmax.f32 %v1045, %v1405
  %v1536 = vmax.f32 %v1048, %v1408
  %v1537 = vmax.f32 %v1051, %v1411
  %v1538 = vmax.f32 %v1054, %v1414
  %v1539 = vmax.f32 %v1057, %v1417
  %v1540 = vmax.f32 %v1060, %v1420
  %v1541 = vmax.f32 %v1063, %v1423
  %v1542 = vmax.f32 %v1066, %v1426
  %v1543 = vmax.f32 %v1069, %v1429
  %v1544 = vmax.f32 %v1072, %v1432
  %v1545 = vmax.f32 %v1075, %v1435
  %v1546 = vmax.f32 %v1078, %v1438
  %v1547 = vmax.f32 %v1081, %v1441
  %v1548 = vmax.f32 %v1084, %v1444
  %v1549 = vmax.f32 %v1087, %v1447
  %v1550 = vmax.f32 %v1090, %v1450
  %v1551 = vmax.f32 %v1093, %v1453
  %v1552 = vmax.f32 %v1096, %v1456
  %v1553 = vmax.f32 %v1099, %v1459
  %v1554 = vmax.f32 %v1102, %v1462
  %v1555 = vmax.f32 %v1105, %v1465
  %v1556 = vmax.f32 %v1108, %v1468
  %v1557 = vmax.f32 %v1111, %v1471
  %v1558 = vmax.f32 %v1114, %v1474
  %v1559 = vmax.f32 %v1117, %v1477
  %v1560 = vmax.f32 %v1120, %v1480
  %v1561 = vmax.f32 %v1123, %v1483
  %v1562 = vmax.f32 %v1126, %v1486
  %v1563 = vmax.f32 %v1129, %v1489
  %v1564 = vmax.f32 %v1132, %v1492
  %v1565 = vmax.f32 %v1135, %v1495
  %v1566 = vmax.f32 %v1138, %v1498
  %v1567 = vmax.f32 %v1141, %v1501
  %v1568 = vmax.f32 %v1144, %v1504
  %v1569 = vmax.f32 %v1147, %v1507
  %v1570 = vmax.f32 %v1150, %v1510
  %v1571 = vmax.f32 %v1153, %v1513
  %v1572 = vmax.f32 %v1156, %v1516
  %v1573 = vmax.f32 %v1159, %v1519
  %v1574 = vmax.f32 %v1162, %v1522
  %v1575 = vmax.f32 %v1165, %v1525
  %v1576 = vmax.f32 %v758, %v1527
  %v1577 = vmax.f32 %v759, %v1528
  %v1578 = vmax.f32 %v760, %v1529
  %v1579 = vmax.f32 %v761, %v1530
  %v1580 = vmax.f32 %v762, %v1531
  %v1581 = vmax.f32 %v763, %v1532
  %v1582 = vmax.f32 %v764, %v1533
  %v1583 = vmax.f32 %v765, %v1534
  %v1584 = vmax.f32 %v766, %v1535
  %v1585 = vmax.f32 %v767, %v1536
  %v1586 = vmax.f32 %v768, %v1537
  %v1587 = vmax.f32 %v769, %v1538
  %v1588 = vmax.f32 %v770, %v1539
  %v1589 = vmax.f32 %v771, %v1540
  %v1590 = vmax.f32 %v772, %v1541
  %v1591 = vmax.f32 %v773, %v1542
  %v1592 = vmax.f32 %v774, %v1543
  %v1593 = vmax.f32 %v775, %v1544
  %v1594 = vmax.f32 %v776, %v1545
  %v1595 = vmax.f32 %v777, %v1546
  %v1596 = vmax.f32 %v778, %v1547
  %v1597 = vmax.f32 %v779, %v1548
  %v1598 = vmax.f32 %v780, %v1549
  %v1599 = vmax.f32 %v781, %v1550
  %v1600 = vmax.f32 %v782, %v1551
  %v1601 = vmax.f32 %v783, %v1552
  %v1602 = vmax.f32 %v784, %v1553
  %v1603 = vmax.f32 %v785, %v1554
  %v1604 = vmax.f32 %v786, %v1555
  %v1605 = vmax.f32 %v787, %v1556
  %v1606 = vmax.f32 %v788, %v1557
  %v1607 = vmax.f32 %v789, %v1558
  %v1608 = vmax.f32 %v790, %v1559
  %v1609 = vmax.f32 %v791, %v1560
  %v1610 = vmax.f32 %v792, %v1561
  %v1611 = vmax.f32 %v793, %v1562
  %v1612 = vmax.f32 %v794, %v1563
  %v1613 = vmax.f32 %v795, %v1564
  %v1614 = vmax.f32 %v796, %v1565
  %v1615 = vmax.f32 %v797, %v1566
  %v1616 = vmax.f32 %v798, %v1567
  %v1617 = vmax.f32 %v799, %v1568
  %v1618 = vmax.f32 %v800, %v1569
  %v1619 = vmax.f32 %v801, %v1570
  %v1620 = vmax.f32 %v802, %v1571
  %v1621 = vmax.f32 %v803, %v1572
  %v1622 = vmax.f32 %v804, %v1573
  %v1623 = vmax.f32 %v805, %v1574
  %v1624 = vmax.f32 %v806, %v1575
  %v1625 = vld [vmem:[%s5] sm:$0x1]
  %v1627 = vperm.slane %v1625, 0
  %v1629 = vadd.f32 %v1576, %v1627
  %v1630 = vadd.f32 %v1577, %v1627
  %v1631 = vadd.f32 %v1578, %v1627
  %v1632 = vadd.f32 %v1579, %v1627
  %v1633 = vadd.f32 %v1580, %v1627
  %v1634 = vadd.f32 %v1581, %v1627
  %v1635 = vadd.f32 %v1582, %v1627
  %v1636 = vadd.f32 %v1583, %v1627
  %v1637 = vadd.f32 %v1584, %v1627
  %v1638 = vadd.f32 %v1585, %v1627
  %v1639 = vadd.f32 %v1586, %v1627
  %v1640 = vadd.f32 %v1587, %v1627
  %v1641 = vadd.f32 %v1588, %v1627
  %v1642 = vadd.f32 %v1589, %v1627
  %v1643 = vadd.f32 %v1590, %v1627
  %v1644 = vadd.f32 %v1591, %v1627
  %v1645 = vadd.f32 %v1592, %v1627
  %v1646 = vadd.f32 %v1593, %v1627
  %v1647 = vadd.f32 %v1594, %v1627
  %v1648 = vadd.f32 %v1595, %v1627
  %v1649 = vadd.f32 %v1596, %v1627
  %v1650 = vadd.f32 %v1597, %v1627
  %v1651 = vadd.f32 %v1598, %v1627
  %v1652 = vadd.f32 %v1599, %v1627
  %v1653 = vadd.f32 %v1600, %v1627
  %v1654 = vadd.f32 %v1601, %v1627
  %v1655 = vadd.f32 %v1602, %v1627
  %v1656 = vadd.f32 %v1603, %v1627
  %v1657 = vadd.f32 %v1604, %v1627
  %v1658 = vadd.f32 %v1605, %v1627
  %v1659 = vadd.f32 %v1606, %v1627
  %v1660 = vadd.f32 %v1607, %v1627
  %v1661 = vadd.f32 %v1608, %v1627
  %v1662 = vadd.f32 %v1609, %v1627
  %v1663 = vadd.f32 %v1610, %v1627
  %v1664 = vadd.f32 %v1611, %v1627
  %v1665 = vadd.f32 %v1612, %v1627
  %v1666 = vadd.f32 %v1613, %v1627
  %v1667 = vadd.f32 %v1614, %v1627
  %v1668 = vadd.f32 %v1615, %v1627
  %v1669 = vadd.f32 %v1616, %v1627
  %v1670 = vadd.f32 %v1617, %v1627
  %v1671 = vadd.f32 %v1618, %v1627
  %v1672 = vadd.f32 %v1619, %v1627
  %v1673 = vadd.f32 %v1620, %v1627
  %v1674 = vadd.f32 %v1621, %v1627
  %v1675 = vadd.f32 %v1622, %v1627
  %v1676 = vadd.f32 %v1623, %v1627
  %v1677 = vadd.f32 %v1624, %v1627
  %v1678 = vmax.f32 %v1629, 0.0
  %v1679 = vmax.f32 %v1630, 0.0
  %v1680 = vmax.f32 %v1631, 0.0
  %v1681 = vmax.f32 %v1632, 0.0
  %v1682 = vmax.f32 %v1633, 0.0
  %v1683 = vmax.f32 %v1634, 0.0
  %v1684 = vmax.f32 %v1635, 0.0
  %v1685 = vmax.f32 %v1636, 0.0
  %v1686 = vmax.f32 %v1637, 0.0
  %v1687 = vmax.f32 %v1638, 0.0
  %v1688 = vmax.f32 %v1639, 0.0
  %v1689 = vmax.f32 %v1640, 0.0
  %v1690 = vmax.f32 %v1641, 0.0
  %v1691 = vmax.f32 %v1642, 0.0
  %v1692 = vmax.f32 %v1643, 0.0
  %v1693 = vmax.f32 %v1644, 0.0
  %v1694 = vmax.f32 %v1645, 0.0
  %v1695 = vmax.f32 %v1646, 0.0
  %v1696 = vmax.f32 %v1647, 0.0
  %v1697 = vmax.f32 %v1648, 0.0
  %v1698 = vmax.f32 %v1649, 0.0
  %v1699 = vmax.f32 %v1650, 0.0
  %v1700 = vmax.f32 %v1651, 0.0
  %v1701 = vmax.f32 %v1652, 0.0
  %v1702 = vmax.f32 %v1653, 0.0
  %v1703 = vmax.f32 %v1654, 0.0
  %v1704 = vmax.f32 %v1655, 0.0
  %v1705 = vmax.f32 %v1656, 0.0
  %v1706 = vmax.f32 %v1657, 0.0
  %v1707 = vmax.f32 %v1658, 0.0
  %v1708 = vmax.f32 %v1659, 0.0
  %v1709 = vmax.f32 %v1660, 0.0
  %v1710 = vmax.f32 %v1661, 0.0
  %v1711 = vmax.f32 %v1662, 0.0
  %v1712 = vmax.f32 %v1663, 0.0
  %v1713 = vmax.f32 %v1664, 0.0
  %v1714 = vmax.f32 %v1665, 0.0
  %v1715 = vmax.f32 %v1666, 0.0
  %v1716 = vmax.f32 %v1667, 0.0
  %v1717 = vmax.f32 %v1668, 0.0
  %v1718 = vmax.f32 %v1669, 0.0
  %v1719 = vmax.f32 %v1670, 0.0
  %v1720 = vmax.f32 %v1671, 0.0
  %v1721 = vmax.f32 %v1672, 0.0
  %v1722 = vmax.f32 %v1673, 0.0
  %v1723 = vmax.f32 %v1674, 0.0
  %v1724 = vmax.f32 %v1675, 0.0
  %v1725 = vmax.f32 %v1676, 0.0
  %v1726 = vmax.f32 %v1677, 0.0
  %vm1727 = vcmask 48128
  %1728 = vst.msk [vmem:[%s6] sm:$0xff] %vm1727, %v1678
  %1729 = vst.msk [vmem:[%s6 + $0x8] sm:$0xff] %vm1727, %v1679
  %1730 = vst.msk [vmem:[%s6 + $0x10] sm:$0xff] %vm1727, %v1680
  %1731 = vst.msk [vmem:[%s6 + $0x18] sm:$0xff] %vm1727, %v1681
  %1732 = vst.msk [vmem:[%s6 + $0x20] sm:$0xff] %vm1727, %v1682
  %1733 = vst.msk [vmem:[%s6 + $0x28] sm:$0xff] %vm1727, %v1683
  %1734 = vst.msk [vmem:[%s6 + $0x30] sm:$0xff] %vm1727, %v1684
  %1735 = vst.msk [vmem:[%s6 + $0x38] sm:$0xff] %vm1727, %v1685
  %1736 = vst.msk [vmem:[%s6 + $0x40] sm:$0xff] %vm1727, %v1686
  %1737 = vst.msk [vmem:[%s6 + $0x48] sm:$0xff] %vm1727, %v1687
  %1738 = vst.msk [vmem:[%s6 + $0x50] sm:$0xff] %vm1727, %v1688
  %1739 = vst.msk [vmem:[%s6 + $0x58] sm:$0xff] %vm1727, %v1689
  %1740 = vst.msk [vmem:[%s6 + $0x60] sm:$0xff] %vm1727, %v1690
  %1741 = vst.msk [vmem:[%s6 + $0x68] sm:$0xff] %vm1727, %v1691
  %1742 = vst.msk [vmem:[%s6 + $0x70] sm:$0xff] %vm1727, %v1692
  %1743 = vst.msk [vmem:[%s6 + $0x78] sm:$0xff] %vm1727, %v1693
  %1744 = vst.msk [vmem:[%s6 + $0x80] sm:$0xff] %vm1727, %v1694
  %1745 = vst.msk [vmem:[%s6 + $0x88] sm:$0xff] %vm1727, %v1695
  %1746 = vst.msk [vmem:[%s6 + $0x90] sm:$0xff] %vm1727, %v1696
  %1747 = vst.msk [vmem:[%s6 + $0x98] sm:$0xff] %vm1727, %v1697
  %1748 = vst.msk [vmem:[%s6 + $0xa0] sm:$0xff] %vm1727, %v1698
  %1749 = vst.msk [vmem:[%s6 + $0xa8] sm:$0xff] %vm1727, %v1699
  %1750 = vst.msk [vmem:[%s6 + $0xb0] sm:$0xff] %vm1727, %v1700
  %1751 = vst.msk [vmem:[%s6 + $0xb8] sm:$0xff] %vm1727, %v1701
  %1752 = vst.msk [vmem:[%s6 + $0xc0] sm:$0xff] %vm1727, %v1702
  %1753 = vst.msk [vmem:[%s6 + $0xc8] sm:$0xff] %vm1727, %v1703
  %1754 = vst.msk [vmem:[%s6 + $0xd0] sm:$0xff] %vm1727, %v1704
  %1755 = vst.msk [vmem:[%s6 + $0xd8] sm:$0xff] %vm1727, %v1705
  %1756 = vst.msk [vmem:[%s6 + $0xe0] sm:$0xff] %vm1727, %v1706
  %1757 = vst.msk [vmem:[%s6 + $0xe8] sm:$0xff] %vm1727, %v1707
  %1758 = vst.msk [vmem:[%s6 + $0xf0] sm:$0xff] %vm1727, %v1708
  %1759 = vst.msk [vmem:[%s6 + $0xf8] sm:$0xff] %vm1727, %v1709
  %1760 = vst.msk [vmem:[%s6 + $0x100] sm:$0xff] %vm1727, %v1710
  %1761 = vst.msk [vmem:[%s6 + $0x108] sm:$0xff] %vm1727, %v1711
  %1762 = vst.msk [vmem:[%s6 + $0x110] sm:$0xff] %vm1727, %v1712
  %1763 = vst.msk [vmem:[%s6 + $0x118] sm:$0xff] %vm1727, %v1713
  %1764 = vst.msk [vmem:[%s6 + $0x120] sm:$0xff] %vm1727, %v1714
  %1765 = vst.msk [vmem:[%s6 + $0x128] sm:$0xff] %vm1727, %v1715
  %1766 = vst.msk [vmem:[%s6 + $0x130] sm:$0xff] %vm1727, %v1716
  %1767 = vst.msk [vmem:[%s6 + $0x138] sm:$0xff] %vm1727, %v1717
  %1768 = vst.msk [vmem:[%s6 + $0x140] sm:$0xff] %vm1727, %v1718
  %1769 = vst.msk [vmem:[%s6 + $0x148] sm:$0xff] %vm1727, %v1719
  %1770 = vst.msk [vmem:[%s6 + $0x150] sm:$0xff] %vm1727, %v1720
  %1771 = vst.msk [vmem:[%s6 + $0x158] sm:$0xff] %vm1727, %v1721
  %1772 = vst.msk [vmem:[%s6 + $0x160] sm:$0xff] %vm1727, %v1722
  %1773 = vst.msk [vmem:[%s6 + $0x168] sm:$0xff] %vm1727, %v1723
  %1774 = vst.msk [vmem:[%s6 + $0x170] sm:$0xff] %vm1727, %v1724
  %1775 = vst.msk [vmem:[%s6 + $0x178] sm:$0xff] %vm1727, %v1725
  %1776 = vst.msk [vmem:[%s6 + $0x180] sm:$0xff] %vm1727, %v1726
  // Predicated region
  $region26: #{lenet_forward.3} parent=0 // pred_check
    _
  $region27: #{lenet_forward.3} parent=0 // pred_check_branch
    %1778 = sbr.rel (0) target = $region29
  $region28: #{lenet_forward.3} parent=0 // pred_region
    _
  $region29: #{lenet_forward.3} parent=0 // pred_fallthru
    _
  // Predicated region
  $region30: #{lenet_forward.3} parent=0 // pred_check
    _
  $region31: #{lenet_forward.3} parent=0 // pred_check_branch
    %1780 = sbr.rel (0) target = $region33
  $region32: #{lenet_forward.3} parent=0 // pred_region
    _
  $region33: #{lenet_forward.3} parent=0 // pred_fallthru
    _

// kernel: lenet_forward.4
$region0: #{lenet_forward.4}
  #allocation0 [shape = 'u32[]', space=smem, size = 0x4, offset = 0x4, fixed_abs, tag = 'smem constant byte address 0x4 - core index']
  #allocation1 [shape = 'u32[72,128]{1,0:T(1,128)}', space=vmem, size = 0x9000, scoped, tag = 'internal scratch']
  %s0 = inlined_call_operand.vmem [shape: f32[50,150], index: 0, kind: input, shape index: {}]
  %s1 = inlined_call_operand.vmem [shape: f32[50,150], index: 1, kind: input, shape index: {}]
  %s2 = inlined_call_operand.vmem [shape: f32[50,150], index: 2, kind: input, shape index: {}]
  %s3 = inlined_call_operand.vmem [shape: f32[50,150], index: 3, kind: input, shape index: {}]
  %s4 = inlined_call_operand.vmem [shape: f32[150,16], index: 4, kind: input, shape index: {}]
  %s5 = inlined_call_operand.vmem [shape: f32[1,16], index: 5, kind: input, shape index: {}]
  %s6 = inlined_call_operand.vmem [shape: f32[50,16], index: 6, kind: output, shape index: {}]
  %s7 = sld [smem:[#allocation0]]
  $region34: #{lenet_forward.4} parent=0
    _
  %s9 = ssub.s32 1, %s7
  %s10 = scalar_select 0, %s9, %s7
  // Predicated region
  $region2: #{lenet_forward.4} parent=0 // pred_check
    _
  $region3: #{lenet_forward.4} parent=0 // pred_check_branch
    %12 = sbr.rel (0) target = $region5
  $region4: #{lenet_forward.4} parent=0 // pred_region
    _
  $region5: #{lenet_forward.4} parent=0 // pred_fallthru
    _
  // Predicated region
  $region6: #{lenet_forward.4} parent=0 // pred_check
    _
  $region7: #{lenet_forward.4} parent=0 // pred_check_branch
    %14 = sbr.rel (0) target = $region9
  $region8: #{lenet_forward.4} parent=0 // pred_region
    _
  $region9: #{lenet_forward.4} parent=0 // pred_fallthru
    _
  // Predicated region
  $region10: #{lenet_forward.4} parent=0 // pred_check
    _
  $region11: #{lenet_forward.4} parent=0 // pred_check_branch
    %16 = sbr.rel (0) target = $region13
  $region12: #{lenet_forward.4} parent=0 // pred_region
    _
  $region13: #{lenet_forward.4} parent=0 // pred_fallthru
    _
  // Predicated region
  $region14: #{lenet_forward.4} parent=0 // pred_check
    _
  $region15: #{lenet_forward.4} parent=0 // pred_check_branch
    %18 = sbr.rel (0) target = $region17
  $region16: #{lenet_forward.4} parent=0 // pred_region
    _
  $region17: #{lenet_forward.4} parent=0 // pred_fallthru
    _
  // Predicated region
  $region18: #{lenet_forward.4} parent=0 // pred_check
    _
  $region19: #{lenet_forward.4} parent=0 // pred_check_branch
    %20 = sbr.rel (0) target = $region21
  $region20: #{lenet_forward.4} parent=0 // pred_region
    _
  $region21: #{lenet_forward.4} parent=0 // pred_fallthru
    _
  // Predicated region
  $region22: #{lenet_forward.4} parent=0 // pred_check
    _
  $region23: #{lenet_forward.4} parent=0 // pred_check_branch
    %22 = sbr.rel (0) target = $region25
  $region24: #{lenet_forward.4} parent=0 // pred_region
    _
  $region25: #{lenet_forward.4} parent=0 // pred_fallthru
    _
  %v23 = vld [vmem:[%s4] sm:$0xff]
  %v24 = vld [vmem:[%s4 + $0x8] sm:$0xff]
  %v25 = vld [vmem:[%s4 + $0x10] sm:$0xff]
  %v26 = vld [vmem:[%s4 + $0x18] sm:$0xff]
  %v27 = vld [vmem:[%s4 + $0x20] sm:$0xff]
  %v28 = vld [vmem:[%s4 + $0x28] sm:$0xff]
  %v29 = vld [vmem:[%s4 + $0x30] sm:$0xff]
  %v30 = vld [vmem:[%s4 + $0x38] sm:$0xff]
  %v31 = vld [vmem:[%s4 + $0x40] sm:$0xff]
  %v32 = vld [vmem:[%s4 + $0x48] sm:$0xff]
  %v33 = vld [vmem:[%s4 + $0x50] sm:$0xff]
  %v34 = vld [vmem:[%s4 + $0x58] sm:$0xff]
  %v35 = vld [vmem:[%s4 + $0x60] sm:$0xff]
  %v36 = vld [vmem:[%s4 + $0x68] sm:$0xff]
  %v37 = vld [vmem:[%s4 + $0x70] sm:$0xff]
  %v38 = vld [vmem:[%s4 + $0x78] sm:$0xff]
  %v39 = vld [vmem:[%s4 + $0x80] sm:$0xff]
  %v40 = vld [vmem:[%s4 + $0x88] sm:$0xff]
  %v41 = vld [vmem:[%s4 + $0x90] sm:$0x3f]
  %v42 = vld [vmem:[%s0] sm:$0xff]
  %v43 = vld [vmem:[%s0 + $0x8] sm:$0xff]
  %v44 = vld [vmem:[%s0 + $0x10] sm:$0xff]
  %v45 = vld [vmem:[%s0 + $0x18] sm:$0xff]
  %v46 = vld [vmem:[%s0 + $0x20] sm:$0xff]
  %v47 = vld [vmem:[%s0 + $0x28] sm:$0xff]
  %v48 = vld [vmem:[%s0 + $0x30] sm:$0xff]
  %v49 = vld [vmem:[%s0 + $0x38] sm:$0xff]
  %v50 = vld [vmem:[%s0 + $0x40] sm:$0xff]
  %v51 = vld [vmem:[%s0 + $0x48] sm:$0xff]
  %v52 = vld [vmem:[%s0 + $0x50] sm:$0xff]
  %v53 = vld [vmem:[%s0 + $0x58] sm:$0xff]
  %v54 = vld [vmem:[%s0 + $0x60] sm:$0x3]
  %v55 = vld [vmem:[%s0 + $0x68] sm:$0x3]
  %vm56 = vcmask 179200
  %v58 = vsel %vm56, %v43, 0
  %v61 = vsel %vm56, %v45, 0
  %v64 = vsel %vm56, %v47, 0
  %v67 = vsel %vm56, %v49, 0
  %v70 = vsel %vm56, %v51, 0
  %v73 = vsel %vm56, %v53, 0
  %v76 = vsel %vm56, %v55, 0
  %vm78 = vcmask 1045504
  %v80 = vsel %vm78, %v41, 0
  %82 = vmatpush.msra.mxu0 %v38
  %83 = vmatpush.msra.mxu0 %v37
  %84 = vmatpush.msra.mxu0 %v36
  %85 = vmatpush.msra.mxu0 %v35
  %86 = vmatpush.msra.mxu0 %v34
  %87 = vmatpush.msra.mxu0 %v33
  %88 = vmatpush.msra.mxu0 %v32
  %89 = vmatpush.msra.mxu0 %v31
  %90 = vmatpush.msra.mxu0 %v30
  %91 = vmatpush.msra.mxu0 %v29
  %92 = vmatpush.msra.mxu0 %v28
  %93 = vmatpush.msra.mxu0 %v27
  %94 = vmatpush.msra.mxu0 %v26
  %95 = vmatpush.msra.mxu0 %v25
  %96 = vmatpush.msra.mxu0 %v24
  %97 = vmatpush.msra.mxu0 %v23
  %98 = vmatmul.f32.gmra.mxu0 %v42
  %v99 = vpop.f32.mrf.mxu0
  %v100 = vadd.f32 0.0, %v99
  %101 = vmatmul.f32.gmra.mxu0 %v44
  %v102 = vpop.f32.mrf.mxu0
  %v103 = vadd.f32 0.0, %v102
  %104 = vmatmul.f32.gmra.mxu0 %v46
  %v105 = vpop.f32.mrf.mxu0
  %v106 = vadd.f32 0.0, %v105
  %107 = vmatmul.f32.gmra.mxu0 %v48
  %v108 = vpop.f32.mrf.mxu0
  %v109 = vadd.f32 0.0, %v108
  %110 = vmatmul.f32.gmra.mxu0 %v50
  %v111 = vpop.f32.mrf.mxu0
  %v112 = vadd.f32 0.0, %v111
  %113 = vmatmul.f32.gmra.mxu0 %v52
  %v114 = vpop.f32.mrf.mxu0
  %v115 = vadd.f32 0.0, %v114
  %116 = vmatmul.f32.gmra.mxu0 %v54
  %v117 = vpop.f32.mrf.mxu0
  %v118 = vadd.f32 0.0, %v117
  %119 = vdwg.mxu0
  %120 = vmatpush.msra.mxu0 0.0
  %121 = vmatpush.msra.mxu0 0.0
  %122 = vmatpush.msra.mxu0 0.0
  %123 = vmatpush.msra.mxu0 0.0
  %124 = vmatpush.msra.mxu0 0.0
  %125 = vmatpush.msra.mxu0 0.0
  %126 = vmatpush.msra.mxu0 0.0
  %127 = vmatpush.msra.mxu0 0.0
  %128 = vmatpush.msra.mxu0 0.0
  %129 = vmatpush.msra.mxu0 0.0
  %130 = vmatpush.msra.mxu0 0.0
  %131 = vmatpush.msra.mxu0 0.0
  %132 = vmatpush.msra.mxu0 0.0
  %133 = vmatpush.msra.mxu0 %v80
  %134 = vmatpush.msra.mxu0 %v40
  %135 = vmatpush.msra.mxu0 %v39
  %136 = vmatmul.f32.gmra.mxu0 %v58
  %v137 = vpop.f32.mrf.mxu0
  %v138 = vadd.f32 %v100, %v137
  %139 = vmatmul.f32.gmra.mxu0 %v61
  %v140 = vpop.f32.mrf.mxu0
  %v141 = vadd.f32 %v103, %v140
  %142 = vmatmul.f32.gmra.mxu0 %v64
  %v143 = vpop.f32.mrf.mxu0
  %v144 = vadd.f32 %v106, %v143
  %145 = vmatmul.f32.gmra.mxu0 %v67
  %v146 = vpop.f32.mrf.mxu0
  %v147 = vadd.f32 %v109, %v146
  %148 = vmatmul.f32.gmra.mxu0 %v70
  %v149 = vpop.f32.mrf.mxu0
  %v150 = vadd.f32 %v112, %v149
  %151 = vmatmul.f32.gmra.mxu0 %v73
  %v152 = vpop.f32.mrf.mxu0
  %v153 = vadd.f32 %v115, %v152
  %154 = vmatmul.f32.gmra.mxu0 %v76
  %v155 = vpop.f32.mrf.mxu0
  %v156 = vadd.f32 %v118, %v155
  %157 = vdwg.mxu0
  %v158 = vld [vmem:[%s1] sm:$0xff]
  %v159 = vld [vmem:[%s1 + $0x8] sm:$0xff]
  %v160 = vld [vmem:[%s1 + $0x10] sm:$0xff]
  %v161 = vld [vmem:[%s1 + $0x18] sm:$0xff]
  %v162 = vld [vmem:[%s1 + $0x20] sm:$0xff]
  %v163 = vld [vmem:[%s1 + $0x28] sm:$0xff]
  %v164 = vld [vmem:[%s1 + $0x30] sm:$0xff]
  %v165 = vld [vmem:[%s1 + $0x38] sm:$0xff]
  %v166 = vld [vmem:[%s1 + $0x40] sm:$0xff]
  %v167 = vld [vmem:[%s1 + $0x48] sm:$0xff]
  %v168 = vld [vmem:[%s1 + $0x50] sm:$0xff]
  %v169 = vld [vmem:[%s1 + $0x58] sm:$0xff]
  %v170 = vld [vmem:[%s1 + $0x60] sm:$0x3]
  %v171 = vld [vmem:[%s1 + $0x68] sm:$0x3]
  %v173 = vsel %vm56, %v159, 0
  %v176 = vsel %vm56, %v161, 0
  %v179 = vsel %vm56, %v163, 0
  %v182 = vsel %vm56, %v165, 0
  %v185 = vsel %vm56, %v167, 0
  %v188 = vsel %vm56, %v169, 0
  %v191 = vsel %vm56, %v171, 0
  %193 = vmatpush.msra.mxu0 %v38
  %194 = vmatpush.msra.mxu0 %v37
  %195 = vmatpush.msra.mxu0 %v36
  %196 = vmatpush.msra.mxu0 %v35
  %197 = vmatpush.msra.mxu0 %v34
  %198 = vmatpush.msra.mxu0 %v33
  %199 = vmatpush.msra.mxu0 %v32
  %200 = vmatpush.msra.mxu0 %v31
  %201 = vmatpush.msra.mxu0 %v30
  %202 = vmatpush.msra.mxu0 %v29
  %203 = vmatpush.msra.mxu0 %v28
  %204 = vmatpush.msra.mxu0 %v27
  %205 = vmatpush.msra.mxu0 %v26
  %206 = vmatpush.msra.mxu0 %v25
  %207 = vmatpush.msra.mxu0 %v24
  %208 = vmatpush.msra.mxu0 %v23
  %209 = vmatmul.f32.gmra.mxu0 %v158
  %v210 = vpop.f32.mrf.mxu0
  %v211 = vadd.f32 0.0, %v210
  %212 = vmatmul.f32.gmra.mxu0 %v160
  %v213 = vpop.f32.mrf.mxu0
  %v214 = vadd.f32 0.0, %v213
  %215 = vmatmul.f32.gmra.mxu0 %v162
  %v216 = vpop.f32.mrf.mxu0
  %v217 = vadd.f32 0.0, %v216
  %218 = vmatmul.f32.gmra.mxu0 %v164
  %v219 = vpop.f32.mrf.mxu0
  %v220 = vadd.f32 0.0, %v219
  %221 = vmatmul.f32.gmra.mxu0 %v166
  %v222 = vpop.f32.mrf.mxu0
  %v223 = vadd.f32 0.0, %v222
  %224 = vmatmul.f32.gmra.mxu0 %v168
  %v225 = vpop.f32.mrf.mxu0
  %v226 = vadd.f32 0.0, %v225
  %227 = vmatmul.f32.gmra.mxu0 %v170
  %v228 = vpop.f32.mrf.mxu0
  %v229 = vadd.f32 0.0, %v228
  %230 = vdwg.mxu0
  %231 = vmatpush.msra.mxu0 0.0
  %232 = vmatpush.msra.mxu0 0.0
  %233 = vmatpush.msra.mxu0 0.0
  %234 = vmatpush.msra.mxu0 0.0
  %235 = vmatpush.msra.mxu0 0.0
  %236 = vmatpush.msra.mxu0 0.0
  %237 = vmatpush.msra.mxu0 0.0
  %238 = vmatpush.msra.mxu0 0.0
  %239 = vmatpush.msra.mxu0 0.0
  %240 = vmatpush.msra.mxu0 0.0
  %241 = vmatpush.msra.mxu0 0.0
  %242 = vmatpush.msra.mxu0 0.0
  %243 = vmatpush.msra.mxu0 0.0
  %244 = vmatpush.msra.mxu0 %v80
  %245 = vmatpush.msra.mxu0 %v40
  %246 = vmatpush.msra.mxu0 %v39
  %247 = vmatmul.f32.gmra.mxu0 %v173
  %v248 = vpop.f32.mrf.mxu0
  %v249 = vadd.f32 %v211, %v248
  %250 = vmatmul.f32.gmra.mxu0 %v176
  %v251 = vpop.f32.mrf.mxu0
  %v252 = vadd.f32 %v214, %v251
  %253 = vmatmul.f32.gmra.mxu0 %v179
  %v254 = vpop.f32.mrf.mxu0
  %v255 = vadd.f32 %v217, %v254
  %256 = vmatmul.f32.gmra.mxu0 %v182
  %v257 = vpop.f32.mrf.mxu0
  %v258 = vadd.f32 %v220, %v257
  %259 = vmatmul.f32.gmra.mxu0 %v185
  %v260 = vpop.f32.mrf.mxu0
  %v261 = vadd.f32 %v223, %v260
  %262 = vmatmul.f32.gmra.mxu0 %v188
  %v263 = vpop.f32.mrf.mxu0
  %v264 = vadd.f32 %v226, %v263
  %265 = vmatmul.f32.gmra.mxu0 %v191
  %v266 = vpop.f32.mrf.mxu0
  %v267 = vadd.f32 %v229, %v266
  %268 = vdwg.mxu0
  %v269 = vmax.f32 %v138, %v249
  %v270 = vmax.f32 %v141, %v252
  %v271 = vmax.f32 %v144, %v255
  %v272 = vmax.f32 %v147, %v258
  %v273 = vmax.f32 %v150, %v261
  %v274 = vmax.f32 %v153, %v264
  %v275 = vmax.f32 %v156, %v267
  %v276 = vld [vmem:[%s2] sm:$0xff]
  %v277 = vld [vmem:[%s2 + $0x8] sm:$0xff]
  %v278 = vld [vmem:[%s2 + $0x10] sm:$0xff]
  %v279 = vld [vmem:[%s2 + $0x18] sm:$0xff]
  %v280 = vld [vmem:[%s2 + $0x20] sm:$0xff]
  %v281 = vld [vmem:[%s2 + $0x28] sm:$0xff]
  %v282 = vld [vmem:[%s2 + $0x30] sm:$0xff]
  %v283 = vld [vmem:[%s2 + $0x38] sm:$0xff]
  %v284 = vld [vmem:[%s2 + $0x40] sm:$0xff]
  %v285 = vld [vmem:[%s2 + $0x48] sm:$0xff]
  %v286 = vld [vmem:[%s2 + $0x50] sm:$0xff]
  %v287 = vld [vmem:[%s2 + $0x58] sm:$0xff]
  %v288 = vld [vmem:[%s2 + $0x60] sm:$0x3]
  %v289 = vld [vmem:[%s2 + $0x68] sm:$0x3]
  %v291 = vsel %vm56, %v277, 0
  %v294 = vsel %vm56, %v279, 0
  %v297 = vsel %vm56, %v281, 0
  %v300 = vsel %vm56, %v283, 0
  %v303 = vsel %vm56, %v285, 0
  %v306 = vsel %vm56, %v287, 0
  %v309 = vsel %vm56, %v289, 0
  %311 = vmatpush.msra.mxu0 %v38
  %312 = vmatpush.msra.mxu0 %v37
  %313 = vmatpush.msra.mxu0 %v36
  %314 = vmatpush.msra.mxu0 %v35
  %315 = vmatpush.msra.mxu0 %v34
  %316 = vmatpush.msra.mxu0 %v33
  %317 = vmatpush.msra.mxu0 %v32
  %318 = vmatpush.msra.mxu0 %v31
  %319 = vmatpush.msra.mxu0 %v30
  %320 = vmatpush.msra.mxu0 %v29
  %321 = vmatpush.msra.mxu0 %v28
  %322 = vmatpush.msra.mxu0 %v27
  %323 = vmatpush.msra.mxu0 %v26
  %324 = vmatpush.msra.mxu0 %v25
  %325 = vmatpush.msra.mxu0 %v24
  %326 = vmatpush.msra.mxu0 %v23
  %327 = vmatmul.f32.gmra.mxu0 %v276
  %v328 = vpop.f32.mrf.mxu0
  %v329 = vadd.f32 0.0, %v328
  %330 = vmatmul.f32.gmra.mxu0 %v278
  %v331 = vpop.f32.mrf.mxu0
  %v332 = vadd.f32 0.0, %v331
  %333 = vmatmul.f32.gmra.mxu0 %v280
  %v334 = vpop.f32.mrf.mxu0
  %v335 = vadd.f32 0.0, %v334
  %336 = vmatmul.f32.gmra.mxu0 %v282
  %v337 = vpop.f32.mrf.mxu0
  %v338 = vadd.f32 0.0, %v337
  %339 = vmatmul.f32.gmra.mxu0 %v284
  %v340 = vpop.f32.mrf.mxu0
  %v341 = vadd.f32 0.0, %v340
  %342 = vmatmul.f32.gmra.mxu0 %v286
  %v343 = vpop.f32.mrf.mxu0
  %v344 = vadd.f32 0.0, %v343
  %345 = vmatmul.f32.gmra.mxu0 %v288
  %v346 = vpop.f32.mrf.mxu0
  %v347 = vadd.f32 0.0, %v346
  %348 = vdwg.mxu0
  %349 = vmatpush.msra.mxu0 0.0
  %350 = vmatpush.msra.mxu0 0.0
  %351 = vmatpush.msra.mxu0 0.0
  %352 = vmatpush.msra.mxu0 0.0
  %353 = vmatpush.msra.mxu0 0.0
  %354 = vmatpush.msra.mxu0 0.0
  %355 = vmatpush.msra.mxu0 0.0
  %356 = vmatpush.msra.mxu0 0.0
  %357 = vmatpush.msra.mxu0 0.0
  %358 = vmatpush.msra.mxu0 0.0
  %359 = vmatpush.msra.mxu0 0.0
  %360 = vmatpush.msra.mxu0 0.0
  %361 = vmatpush.msra.mxu0 0.0
  %362 = vmatpush.msra.mxu0 %v80
  %363 = vmatpush.msra.mxu0 %v40
  %364 = vmatpush.msra.mxu0 %v39
  %365 = vmatmul.f32.gmra.mxu0 %v291
  %v366 = vpop.f32.mrf.mxu0
  %v367 = vadd.f32 %v329, %v366
  %368 = vmatmul.f32.gmra.mxu0 %v294
  %v369 = vpop.f32.mrf.mxu0
  %v370 = vadd.f32 %v332, %v369
  %371 = vmatmul.f32.gmra.mxu0 %v297
  %v372 = vpop.f32.mrf.mxu0
  %v373 = vadd.f32 %v335, %v372
  %374 = vmatmul.f32.gmra.mxu0 %v300
  %v375 = vpop.f32.mrf.mxu0
  %v376 = vadd.f32 %v338, %v375
  %377 = vmatmul.f32.gmra.mxu0 %v303
  %v378 = vpop.f32.mrf.mxu0
  %v379 = vadd.f32 %v341, %v378
  %380 = vmatmul.f32.gmra.mxu0 %v306
  %v381 = vpop.f32.mrf.mxu0
  %v382 = vadd.f32 %v344, %v381
  %383 = vmatmul.f32.gmra.mxu0 %v309
  %v384 = vpop.f32.mrf.mxu0
  %v385 = vadd.f32 %v347, %v384
  %386 = vdwg.mxu0
  %v387 = vld [vmem:[%s3] sm:$0xff]
  %v388 = vld [vmem:[%s3 + $0x8] sm:$0xff]
  %v389 = vld [vmem:[%s3 + $0x10] sm:$0xff]
  %v390 = vld [vmem:[%s3 + $0x18] sm:$0xff]
  %v391 = vld [vmem:[%s3 + $0x20] sm:$0xff]
  %v392 = vld [vmem:[%s3 + $0x28] sm:$0xff]
  %v393 = vld [vmem:[%s3 + $0x30] sm:$0xff]
  %v394 = vld [vmem:[%s3 + $0x38] sm:$0xff]
  %v395 = vld [vmem:[%s3 + $0x40] sm:$0xff]
  %v396 = vld [vmem:[%s3 + $0x48] sm:$0xff]
  %v397 = vld [vmem:[%s3 + $0x50] sm:$0xff]
  %v398 = vld [vmem:[%s3 + $0x58] sm:$0xff]
  %v399 = vld [vmem:[%s3 + $0x60] sm:$0x3]
  %v400 = vld [vmem:[%s3 + $0x68] sm:$0x3]
  %v402 = vsel %vm56, %v388, 0
  %v405 = vsel %vm56, %v390, 0
  %v408 = vsel %vm56, %v392, 0
  %v411 = vsel %vm56, %v394, 0
  %v414 = vsel %vm56, %v396, 0
  %v417 = vsel %vm56, %v398, 0
  %v420 = vsel %vm56, %v400, 0
  %422 = vmatpush.msra.mxu0 %v38
  %423 = vmatpush.msra.mxu0 %v37
  %424 = vmatpush.msra.mxu0 %v36
  %425 = vmatpush.msra.mxu0 %v35
  %426 = vmatpush.msra.mxu0 %v34
  %427 = vmatpush.msra.mxu0 %v33
  %428 = vmatpush.msra.mxu0 %v32
  %429 = vmatpush.msra.mxu0 %v31
  %430 = vmatpush.msra.mxu0 %v30
  %431 = vmatpush.msra.mxu0 %v29
  %432 = vmatpush.msra.mxu0 %v28
  %433 = vmatpush.msra.mxu0 %v27
  %434 = vmatpush.msra.mxu0 %v26
  %435 = vmatpush.msra.mxu0 %v25
  %436 = vmatpush.msra.mxu0 %v24
  %437 = vmatpush.msra.mxu0 %v23
  %438 = vmatmul.f32.gmra.mxu0 %v387
  %v439 = vpop.f32.mrf.mxu0
  %v440 = vadd.f32 0.0, %v439
  %441 = vmatmul.f32.gmra.mxu0 %v389
  %v442 = vpop.f32.mrf.mxu0
  %v443 = vadd.f32 0.0, %v442
  %444 = vmatmul.f32.gmra.mxu0 %v391
  %v445 = vpop.f32.mrf.mxu0
  %v446 = vadd.f32 0.0, %v445
  %447 = vmatmul.f32.gmra.mxu0 %v393
  %v448 = vpop.f32.mrf.mxu0
  %v449 = vadd.f32 0.0, %v448
  %450 = vmatmul.f32.gmra.mxu0 %v395
  %v451 = vpop.f32.mrf.mxu0
  %v452 = vadd.f32 0.0, %v451
  %453 = vmatmul.f32.gmra.mxu0 %v397
  %v454 = vpop.f32.mrf.mxu0
  %v455 = vadd.f32 0.0, %v454
  %456 = vmatmul.f32.gmra.mxu0 %v399
  %v457 = vpop.f32.mrf.mxu0
  %v458 = vadd.f32 0.0, %v457
  %459 = vdwg.mxu0
  %460 = vmatpush.msra.mxu0 0.0
  %461 = vmatpush.msra.mxu0 0.0
  %462 = vmatpush.msra.mxu0 0.0
  %463 = vmatpush.msra.mxu0 0.0
  %464 = vmatpush.msra.mxu0 0.0
  %465 = vmatpush.msra.mxu0 0.0
  %466 = vmatpush.msra.mxu0 0.0
  %467 = vmatpush.msra.mxu0 0.0
  %468 = vmatpush.msra.mxu0 0.0
  %469 = vmatpush.msra.mxu0 0.0
  %470 = vmatpush.msra.mxu0 0.0
  %471 = vmatpush.msra.mxu0 0.0
  %472 = vmatpush.msra.mxu0 0.0
  %473 = vmatpush.msra.mxu0 %v80
  %474 = vmatpush.msra.mxu0 %v40
  %475 = vmatpush.msra.mxu0 %v39
  %476 = vmatmul.f32.gmra.mxu0 %v402
  %v477 = vpop.f32.mrf.mxu0
  %v478 = vadd.f32 %v440, %v477
  %479 = vmatmul.f32.gmra.mxu0 %v405
  %v480 = vpop.f32.mrf.mxu0
  %v481 = vadd.f32 %v443, %v480
  %482 = vmatmul.f32.gmra.mxu0 %v408
  %v483 = vpop.f32.mrf.mxu0
  %v484 = vadd.f32 %v446, %v483
  %485 = vmatmul.f32.gmra.mxu0 %v411
  %v486 = vpop.f32.mrf.mxu0
  %v487 = vadd.f32 %v449, %v486
  %488 = vmatmul.f32.gmra.mxu0 %v414
  %v489 = vpop.f32.mrf.mxu0
  %v490 = vadd.f32 %v452, %v489
  %491 = vmatmul.f32.gmra.mxu0 %v417
  %v492 = vpop.f32.mrf.mxu0
  %v493 = vadd.f32 %v455, %v492
  %494 = vmatmul.f32.gmra.mxu0 %v420
  %v495 = vpop.f32.mrf.mxu0
  %v496 = vadd.f32 %v458, %v495
  %497 = vdwg.mxu0
  %v498 = vmax.f32 %v367, %v478
  %v499 = vmax.f32 %v370, %v481
  %v500 = vmax.f32 %v373, %v484
  %v501 = vmax.f32 %v376, %v487
  %v502 = vmax.f32 %v379, %v490
  %v503 = vmax.f32 %v382, %v493
  %v504 = vmax.f32 %v385, %v496
  %v505 = vmax.f32 %v269, %v498
  %v506 = vmax.f32 %v270, %v499
  %v507 = vmax.f32 %v271, %v500
  %v508 = vmax.f32 %v272, %v501
  %v509 = vmax.f32 %v273, %v502
  %v510 = vmax.f32 %v274, %v503
  %v511 = vmax.f32 %v275, %v504
  %v512 = vld [vmem:[%s5] sm:$0x1]
  %v514 = vperm.slane %v512, 0
  %v516 = vadd.f32 %v505, %v514
  %v517 = vadd.f32 %v506, %v514
  %v518 = vadd.f32 %v507, %v514
  %v519 = vadd.f32 %v508, %v514
  %v520 = vadd.f32 %v509, %v514
  %v521 = vadd.f32 %v510, %v514
  %v522 = vadd.f32 %v511, %v514
  %v523 = vmax.f32 %v516, 0.0
  %v524 = vmax.f32 %v517, 0.0
  %v525 = vmax.f32 %v518, 0.0
  %v526 = vmax.f32 %v519, 0.0
  %v527 = vmax.f32 %v520, 0.0
  %v528 = vmax.f32 %v521, 0.0
  %v529 = vmax.f32 %v522, 0.0
  %vm530 = vcmask 130048
  %531 = vst.msk [vmem:[%s6] sm:$0xff] %vm530, %v523
  %532 = vst.msk [vmem:[%s6 + $0x8] sm:$0xff] %vm530, %v524
  %533 = vst.msk [vmem:[%s6 + $0x10] sm:$0xff] %vm530, %v525
  %534 = vst.msk [vmem:[%s6 + $0x18] sm:$0xff] %vm530, %v526
  %535 = vst.msk [vmem:[%s6 + $0x20] sm:$0xff] %vm530, %v527
  %536 = vst.msk [vmem:[%s6 + $0x28] sm:$0xff] %vm530, %v528
  %vm537 = vcmask 123904
  %538 = vst.msk [vmem:[%s6 + $0x30] sm:$0x3] %vm537, %v529
  // Predicated region
  $region26: #{lenet_forward.4} parent=0 // pred_check
    _
  $region27: #{lenet_forward.4} parent=0 // pred_check_branch
    %540 = sbr.rel (0) target = $region29
  $region28: #{lenet_forward.4} parent=0 // pred_region
    _
  $region29: #{lenet_forward.4} parent=0 // pred_fallthru
    _
  // Predicated region
  $region30: #{lenet_forward.4} parent=0 // pred_check
    _
  $region31: #{lenet_forward.4} parent=0 // pred_check_branch
    %542 = sbr.rel (0) target = $region33
  $region32: #{lenet_forward.4} parent=0 // pred_region
    _
  $region33: #{lenet_forward.4} parent=0 // pred_fallthru
    _

// kernel: lenet_forward.5
$region0: #{lenet_forward.5}
  #allocation0 [shape = 'u32[]', space=smem, size = 0x4, offset = 0x4, fixed_abs, tag = 'smem constant byte address 0x4 - core index']
  #allocation1 [shape = 'u32[72,128]{1,0:T(1,128)}', space=vmem, size = 0x9000, scoped, tag = 'internal scratch']
  %s0 = inlined_call_operand.vmem [shape: f32[2,400], index: 0, kind: input, shape index: {}]
  %s1 = inlined_call_operand.vmem [shape: f32[400,128], index: 1, kind: input, shape index: {}]
  %s2 = inlined_call_operand.vmem [shape: f32[1,128], index: 2, kind: input, shape index: {}]
  %s3 = inlined_call_operand.vmem [shape: f32[128,128], index: 3, kind: input, shape index: {}]
  %s4 = inlined_call_operand.vmem [shape: f32[1,128], index: 4, kind: input, shape index: {}]
  %s5 = inlined_call_operand.vmem [shape: f32[128,128], index: 5, kind: input, shape index: {}]
  %s6 = inlined_call_operand.vmem [shape: f32[1,128], index: 6, kind: input, shape index: {}]
  %s7 = inlined_call_operand.hbm [shape: f32[2,128], index: 7, kind: output, shape index: {}]
  %s8 = sld [smem:[#allocation0]]
  $region38: #{lenet_forward.5} parent=0
    _
  %s10 = ssub.s32 1, %s8
  %s11 = scalar_select 0, %s10, %s8
  $region1: #{lenet_forward.5} parent=0
    #allocation2 [shape = 'u8[1024]{0}', space=vmem, size = 0x400, scoped, tag = 'output window, operand 0, single buffered']
    #allocation3 [shape = 's32[1]{0}', space=sflag, size = 0x4, scoped, tag = 'scoped memory for lenet_forward.5']
    %12 = vsyncpa [#allocation3], 0
    // Predicated region
    $region2: #{lenet_forward.5} parent=1 // pred_check
      _
    $region3: #{lenet_forward.5} parent=1 // pred_check_branch
      %14 = sbr.rel (0) target = $region5
    $region4: #{lenet_forward.5} parent=1 // pred_region
      _
    $region5: #{lenet_forward.5} parent=1 // pred_fallthru
      _
    // Predicated region
    $region6: #{lenet_forward.5} parent=1 // pred_check
      _
    $region7: #{lenet_forward.5} parent=1 // pred_check_branch
      %16 = sbr.rel (0) target = $region9
    $region8: #{lenet_forward.5} parent=1 // pred_region
      _
    $region9: #{lenet_forward.5} parent=1 // pred_fallthru
      _
    // Predicated region
    $region10: #{lenet_forward.5} parent=1 // pred_check
      _
    $region11: #{lenet_forward.5} parent=1 // pred_check_branch
      %18 = sbr.rel (0) target = $region13
    $region12: #{lenet_forward.5} parent=1 // pred_region
      _
    $region13: #{lenet_forward.5} parent=1 // pred_fallthru
      _
    // Predicated region
    $region14: #{lenet_forward.5} parent=1 // pred_check
      _
    $region15: #{lenet_forward.5} parent=1 // pred_check_branch
      %20 = sbr.rel (0) target = $region17
    $region16: #{lenet_forward.5} parent=1 // pred_region
      _
    $region17: #{lenet_forward.5} parent=1 // pred_fallthru
      _
    // Predicated region
    $region18: #{lenet_forward.5} parent=1 // pred_check
      _
    $region19: #{lenet_forward.5} parent=1 // pred_check_branch
      %22 = sbr.rel (0) target = $region21
    $region20: #{lenet_forward.5} parent=1 // pred_region
      _
    $region21: #{lenet_forward.5} parent=1 // pred_fallthru
      _
    // Predicated region
    $region22: #{lenet_forward.5} parent=1 // pred_check
      _
    $region23: #{lenet_forward.5} parent=1 // pred_check_branch
      %24 = sbr.rel (0) target = $region25
    $region24: #{lenet_forward.5} parent=1 // pred_region
      _
    $region25: #{lenet_forward.5} parent=1 // pred_fallthru
      _
    // Predicated region
    $region26: #{lenet_forward.5} parent=1 // pred_check
      _
    $region27: #{lenet_forward.5} parent=1 // pred_check_branch
      %26 = sbr.rel (0) target = $region29
    $region28: #{lenet_forward.5} parent=1 // pred_region
      _
    $region29: #{lenet_forward.5} parent=1 // pred_fallthru
      _
    %v27 = vld [vmem:[%s0] sm:$0xff]
    %v28 = vld [vmem:[%s1] sm:$0xff]
    %v29 = vld [vmem:[%s1 + $0x8] sm:$0xff]
    %v30 = vld [vmem:[%s1 + $0x10] sm:$0xff]
    %v31 = vld [vmem:[%s1 + $0x18] sm:$0xff]
    %v32 = vld [vmem:[%s1 + $0x20] sm:$0xff]
    %v33 = vld [vmem:[%s1 + $0x28] sm:$0xff]
    %v34 = vld [vmem:[%s1 + $0x30] sm:$0xff]
    %v35 = vld [vmem:[%s1 + $0x38] sm:$0xff]
    %v36 = vld [vmem:[%s1 + $0x40] sm:$0xff]
    %v37 = vld [vmem:[%s1 + $0x48] sm:$0xff]
    %v38 = vld [vmem:[%s1 + $0x50] sm:$0xff]
    %v39 = vld [vmem:[%s1 + $0x58] sm:$0xff]
    %v40 = vld [vmem:[%s1 + $0x60] sm:$0xff]
    %v41 = vld [vmem:[%s1 + $0x68] sm:$0xff]
    %v42 = vld [vmem:[%s1 + $0x70] sm:$0xff]
    %v43 = vld [vmem:[%s1 + $0x78] sm:$0xff]
    %v44 = vld [vmem:[%s1 + $0x80] sm:$0xff]
    %v45 = vld [vmem:[%s1 + $0x88] sm:$0xff]
    %v46 = vld [vmem:[%s1 + $0x90] sm:$0xff]
    %v47 = vld [vmem:[%s1 + $0x98] sm:$0xff]
    %v48 = vld [vmem:[%s1 + $0xa0] sm:$0xff]
    %v49 = vld [vmem:[%s1 + $0xa8] sm:$0xff]
    %v50 = vld [vmem:[%s1 + $0xb0] sm:$0xff]
    %v51 = vld [vmem:[%s1 + $0xb8] sm:$0xff]
    %v52 = vld [vmem:[%s1 + $0xc0] sm:$0xff]
    %v53 = vld [vmem:[%s1 + $0xc8] sm:$0xff]
    %v54 = vld [vmem:[%s1 + $0xd0] sm:$0xff]
    %v55 = vld [vmem:[%s1 + $0xd8] sm:$0xff]
    %v56 = vld [vmem:[%s1 + $0xe0] sm:$0xff]
    %v57 = vld [vmem:[%s1 + $0xe8] sm:$0xff]
    %v58 = vld [vmem:[%s1 + $0xf0] sm:$0xff]
    %v59 = vld [vmem:[%s1 + $0xf8] sm:$0xff]
    %v60 = vld [vmem:[%s1 + $0x100] sm:$0xff]
    %v61 = vld [vmem:[%s1 + $0x108] sm:$0xff]
    %v62 = vld [vmem:[%s1 + $0x110] sm:$0xff]
    %v63 = vld [vmem:[%s1 + $0x118] sm:$0xff]
    %v64 = vld [vmem:[%s1 + $0x120] sm:$0xff]
    %v65 = vld [vmem:[%s1 + $0x128] sm:$0xff]
    %v66 = vld [vmem:[%s1 + $0x130] sm:$0xff]
    %v67 = vld [vmem:[%s1 + $0x138] sm:$0xff]
    %v68 = vld [vmem:[%s1 + $0x140] sm:$0xff]
    %v69 = vld [vmem:[%s1 + $0x148] sm:$0xff]
    %v70 = vld [vmem:[%s1 + $0x150] sm:$0xff]
    %v71 = vld [vmem:[%s1 + $0x158] sm:$0xff]
    %v72 = vld [vmem:[%s1 + $0x160] sm:$0xff]
    %v73 = vld [vmem:[%s1 + $0x168] sm:$0xff]
    %v74 = vld [vmem:[%s1 + $0x170] sm:$0xff]
    %v75 = vld [vmem:[%s1 + $0x178] sm:$0xff]
    %v76 = vld [vmem:[%s1 + $0x180] sm:$0xff]
    %v77 = vld [vmem:[%s1 + $0x188] sm:$0xff]
    %v78 = vld [vmem:[%s2] sm:$0x1]
    %v80 = vperm.slane %v78, 0
    %83 = vst [vmem:[#allocation1] ss:$4 sm:$0xff] %v27
    %v84 = vld.sshfl [vmem:[#allocation1] sm:$0xff pattern:$0x73625140]
    %v85 = vld.sshfl [vmem:[#allocation1 + $0x8] sm:$0xff pattern:$0x73625140]
    %v86 = vld.sshfl [vmem:[#allocation1 + $0x10] sm:$0xff pattern:$0x73625140]
    %v87 = vld.sshfl [vmem:[#allocation1 + $0x18] sm:$0xff pattern:$0x73625140]
    %vm91 = vcmask 130048
    %v92 = vsel %vm91, %v87, 0
    %94 = vmatpush.msra.mxu0 %v43
    %95 = vmatpush.msra.mxu0 %v42
    %96 = vmatpush.msra.mxu0 %v41
    %97 = vmatpush.msra.mxu0 %v40
    %98 = vmatpush.msra.mxu0 %v39
    %99 = vmatpush.msra.mxu0 %v38
    %100 = vmatpush.msra.mxu0 %v37
    %101 = vmatpush.msra.mxu0 %v36
    %102 = vmatpush.msra.mxu0 %v35
    %103 = vmatpush.msra.mxu0 %v34
    %104 = vmatpush.msra.mxu0 %v33
    %105 = vmatpush.msra.mxu0 %v32
    %106 = vmatpush.msra.mxu0 %v31
    %107 = vmatpush.msra.mxu0 %v30
    %108 = vmatpush.msra.mxu0 %v29
    %109 = vmatpush.msra.mxu0 %v28
    %110 = vmatmul.f32.gmra.mxu0 %v84
    %v111 = vpop.f32.mrf.mxu0
    %v112 = vadd.f32 %v80, %v111
    %113 = vdwg.mxu0
    %114 = vmatpush.msra.mxu0 %v59
    %115 = vmatpush.msra.mxu0 %v58
    %116 = vmatpush.msra.mxu0 %v57
    %117 = vmatpush.msra.mxu0 %v56
    %118 = vmatpush.msra.mxu0 %v55
    %119 = vmatpush.msra.mxu0 %v54
    %120 = vmatpush.msra.mxu0 %v53
    %121 = vmatpush.msra.mxu0 %v52
    %122 = vmatpush.msra.mxu0 %v51
    %123 = vmatpush.msra.mxu0 %v50
    %124 = vmatpush.msra.mxu0 %v49
    %125 = vmatpush.msra.mxu0 %v48
    %126 = vmatpush.msra.mxu0 %v47
    %127 = vmatpush.msra.mxu0 %v46
    %128 = vmatpush.msra.mxu0 %v45
    %129 = vmatpush.msra.mxu0 %v44
    %130 = vmatmul.f32.gmra.mxu0 %v85
    %v131 = vpop.f32.mrf.mxu0
    %v132 = vadd.f32 %v112, %v131
    %133 = vdwg.mxu0
    %134 = vmatpush.msra.mxu0 %v75
    %135 = vmatpush.msra.mxu0 %v74
    %136 = vmatpush.msra.mxu0 %v73
    %137 = vmatpush.msra.mxu0 %v72
    %138 = vmatpush.msra.mxu0 %v71
    %139 = vmatpush.msra.mxu0 %v70
    %140 = vmatpush.msra.mxu0 %v69
    %141 = vmatpush.msra.mxu0 %v68
    %142 = vmatpush.msra.mxu0 %v67
    %143 = vmatpush.msra.mxu0 %v66
    %144 = vmatpush.msra.mxu0 %v65
    %145 = vmatpush.msra.mxu0 %v64
    %146 = vmatpush.msra.mxu0 %v63
    %147 = vmatpush.msra.mxu0 %v62
    %148 = vmatpush.msra.mxu0 %v61
    %149 = vmatpush.msra.mxu0 %v60
    %150 = vmatmul.f32.gmra.mxu0 %v86
    %v151 = vpop.f32.mrf.mxu0
    %v152 = vadd.f32 %v132, %v151
    %153 = vdwg.mxu0
    %154 = vmatpush.msra.mxu0 0.0
    %155 = vmatpush.msra.mxu0 0.0
    %156 = vmatpush.msra.mxu0 0.0
    %157 = vmatpush.msra.mxu0 0.0
    %158 = vmatpush.msra.mxu0 0.0
    %159 = vmatpush.msra.mxu0 0.0
    %160 = vmatpush.msra.mxu0 0.0
    %161 = vmatpush.msra.mxu0 0.0
    %162 = vmatpush.msra.mxu0 0.0
    %163 = vmatpush.msra.mxu0 0.0
    %164 = vmatpush.msra.mxu0 0.0
    %165 = vmatpush.msra.mxu0 0.0
    %166 = vmatpush.msra.mxu0 0.0
    %167 = vmatpush.msra.mxu0 0.0
    %168 = vmatpush.msra.mxu0 %v77
    %169 = vmatpush.msra.mxu0 %v76
    %170 = vmatmul.f32.gmra.mxu0 %v92
    %v171 = vpop.f32.mrf.mxu0
    %v172 = vadd.f32 %v152, %v171
    %173 = vdwg.mxu0
    %v174 = vmax.f32 %v172, 0.0
    %v175 = vld [vmem:[%s3] sm:$0xff]
    %v176 = vld [vmem:[%s3 + $0x8] sm:$0xff]
    %v177 = vld [vmem:[%s3 + $0x10] sm:$0xff]
    %v178 = vld [vmem:[%s3 + $0x18] sm:$0xff]
    %v179 = vld [vmem:[%s3 + $0x20] sm:$0xff]
    %v180 = vld [vmem:[%s3 + $0x28] sm:$0xff]
    %v181 = vld [vmem:[%s3 + $0x30] sm:$0xff]
    %v182 = vld [vmem:[%s3 + $0x38] sm:$0xff]
    %v183 = vld [vmem:[%s3 + $0x40] sm:$0xff]
    %v184 = vld [vmem:[%s3 + $0x48] sm:$0xff]
    %v185 = vld [vmem:[%s3 + $0x50] sm:$0xff]
    %v186 = vld [vmem:[%s3 + $0x58] sm:$0xff]
    %v187 = vld [vmem:[%s3 + $0x60] sm:$0xff]
    %v188 = vld [vmem:[%s3 + $0x68] sm:$0xff]
    %v189 = vld [vmem:[%s3 + $0x70] sm:$0xff]
    %v190 = vld [vmem:[%s3 + $0x78] sm:$0xff]
    %v191 = vld [vmem:[%s4] sm:$0x1]
    %v193 = vperm.slane %v191, 0
    %195 = vmatpush.msra.mxu0 %v190
    %196 = vmatpush.msra.mxu0 %v189
    %197 = vmatpush.msra.mxu0 %v188
    %198 = vmatpush.msra.mxu0 %v187
    %199 = vmatpush.msra.mxu0 %v186
    %200 = vmatpush.msra.mxu0 %v185
    %201 = vmatpush.msra.mxu0 %v184
    %202 = vmatpush.msra.mxu0 %v183
    %203 = vmatpush.msra.mxu0 %v182
    %204 = vmatpush.msra.mxu0 %v181
    %205 = vmatpush.msra.mxu0 %v180
    %206 = vmatpush.msra.mxu0 %v179
    %207 = vmatpush.msra.mxu0 %v178
    %208 = vmatpush.msra.mxu0 %v177
    %209 = vmatpush.msra.mxu0 %v176
    %210 = vmatpush.msra.mxu0 %v175
    %211 = vmatmul.f32.gmra.mxu0 %v174
    %v212 = vpop.f32.mrf.mxu0
    %v213 = vadd.f32 %v193, %v212
    %214 = vdwg.mxu0
    %v215 = vmax.f32 %v213, 0.0
    %v216 = vld [vmem:[%s5] sm:$0xff]
    %v217 = vld [vmem:[%s5 + $0x8] sm:$0xff]
    %v218 = vld [vmem:[%s5 + $0x10] sm:$0xff]
    %v219 = vld [vmem:[%s5 + $0x18] sm:$0xff]
    %v220 = vld [vmem:[%s5 + $0x20] sm:$0xff]
    %v221 = vld [vmem:[%s5 + $0x28] sm:$0xff]
    %v222 = vld [vmem:[%s5 + $0x30] sm:$0xff]
    %v223 = vld [vmem:[%s5 + $0x38] sm:$0xff]
    %v224 = vld [vmem:[%s5 + $0x40] sm:$0xff]
    %v225 = vld [vmem:[%s5 + $0x48] sm:$0xff]
    %v226 = vld [vmem:[%s5 + $0x50] sm:$0xff]
    %v227 = vld [vmem:[%s5 + $0x58] sm:$0xff]
    %v228 = vld [vmem:[%s5 + $0x60] sm:$0xff]
    %v229 = vld [vmem:[%s5 + $0x68] sm:$0xff]
    %v230 = vld [vmem:[%s5 + $0x70] sm:$0xff]
    %v231 = vld [vmem:[%s5 + $0x78] sm:$0xff]
    %v232 = vld [vmem:[%s6] sm:$0x1]
    %v234 = vperm.slane %v232, 0
    %236 = vmatpush.msra.mxu0 %v231
    %237 = vmatpush.msra.mxu0 %v230
    %238 = vmatpush.msra.mxu0 %v229
    %239 = vmatpush.msra.mxu0 %v228
    %240 = vmatpush.msra.mxu0 %v227
    %241 = vmatpush.msra.mxu0 %v226
    %242 = vmatpush.msra.mxu0 %v225
    %243 = vmatpush.msra.mxu0 %v224
    %244 = vmatpush.msra.mxu0 %v223
    %245 = vmatpush.msra.mxu0 %v222
    %246 = vmatpush.msra.mxu0 %v221
    %247 = vmatpush.msra.mxu0 %v220
    %248 = vmatpush.msra.mxu0 %v219
    %249 = vmatpush.msra.mxu0 %v218
    %250 = vmatpush.msra.mxu0 %v217
    %251 = vmatpush.msra.mxu0 %v216
    %252 = vmatmul.f32.gmra.mxu0 %v215
    %v253 = vpop.f32.mrf.mxu0
    %v254 = vadd.f32 %v234, %v253
    %255 = vdwg.mxu0
    %256 = vst [vmem:[#allocation2] sm:$0x3] %v254
    // Predicated region
    $region30: #{lenet_forward.5} parent=1 // pred_check
      _
    $region31: #{lenet_forward.5} parent=1 // pred_check_branch
      %258 = sbr.rel (0) target = $region33
    $region32: #{lenet_forward.5} parent=1 // pred_region
      %260 = vsyncadd [#allocation3], 0
      %s262 = sshll.u32 [#allocation2], 4
      %s263 = int_to_ptr.vmem [resolvable:$true] %s262
      %s264 = sshll.u32 %s7, 4
      %s265 = int_to_ptr.hbm [resolvable:$true] %s264
      %267 = dma.vmem_to_hbm [thread:$0]  %s263, 32, %s265, [#allocation3]
    $region33: #{lenet_forward.5} parent=1 // pred_fallthru
      _
    // Predicated region
    $region34: #{lenet_forward.5} parent=1 // pred_check
      _
    $region35: #{lenet_forward.5} parent=1 // pred_check_branch
      %269 = sbr.rel (0) target = $region37
    $region36: #{lenet_forward.5} parent=1 // pred_region
      %271 = dma.done [#allocation3], 32
    $region37: #{lenet_forward.5} parent=1 // pred_fallthru
      _
    %272 = vsyncpa [#allocation3], 1

</llo_original>
